<compile_context>
chip_gen: v7x
topology: tpu7x:2x2x1
jax: 0.10.0
libtpu: 0.0.40
codegen_flags: <defaults>
</compile_context>

<pallas_src>
import math
import functools

import jax
import jax.numpy as jnp
from jax.experimental import pallas as pl
from jax.experimental.pallas import tpu as pltpu


def _mhsa_kernel(q_ref, k_ref, v_ref, wq_ref, wk_ref, wv_ref, o_ref,
                 *, head: int, d_k: int):
    """Processes one block of `bt` batch elements per grid step.

    q_ref/k_ref/v_ref/o_ref: [bt, S, H] VMEM tiles
    wq_ref/wk_ref/wv_ref:    [H, H]     VMEM tiles (x @ W convention)
    """
    bt, s, hd = q_ref.shape
    m = bt * s

    # Flatten (bt, S) so each projection is one big [m, H] x [H, H] MXU matmul.
    xq = q_ref[...].reshape(m, hd)
    xk = k_ref[...].reshape(m, hd)
    xv = v_ref[...].reshape(m, hd)

    q_proj = jnp.maximum(
        jnp.dot(xq, wq_ref[...], preferred_element_type=jnp.float32), 0.0)
    k_proj = jnp.dot(xk, wk_ref[...], preferred_element_type=jnp.float32)
    v_proj = jnp.dot(xv, wv_ref[...], preferred_element_type=jnp.float32)

    q_proj = q_proj.reshape(bt, s, hd)
    k_proj = k_proj.reshape(bt, s, hd)
    v_proj = v_proj.reshape(bt, s, hd)

    scale = 1.0 / math.sqrt(d_k)  # == PyTorch's / sqrt(q.shape[-1]) after head split

    head_outs = []
    for h in range(head):  # static unroll; heads are independent
        lo = h * d_k
        qh = q_proj[:, :, lo:lo + d_k] * scale   # fold scale into q (d_k <= S elems)
        kh = k_proj[:, :, lo:lo + d_k]
        vh = v_proj[:, :, lo:lo + d_k]

        # Batched over the batch block, contracting d_k; no materialized .T.
        sc = jnp.einsum('bqd,bkd->bqk', qh, kh,
                        preferred_element_type=jnp.float32)        # [bt, S, S]

        # Numerically stable softmax over the last dim (all math in f32).
        sc = sc - jnp.max(sc, axis=-1, keepdims=True)
        p = jnp.exp(sc)
        denom = jnp.sum(p, axis=-1, keepdims=True)
        r = pl.reciprocal(denom, approx=True)      # EUP slot (otherwise idle)
        r = r * (2.0 - denom * r)                  # 1 Newton step -> ~f32-exact

        out_h = jnp.einsum('bqk,bkd->bqd', p, vh,
                           preferred_element_type=jnp.float32)     # [bt, S, d_k]
        head_outs.append(out_h * r)                # normalize after PV matmul

    out = jnp.concatenate(head_outs, axis=-1)      # [bt, S, H]
    o_ref[...] = out.astype(o_ref.dtype)           # single lane-dense store


def _pick_block_b(B: int, S: int, H: int, itemsize: int = 4) -> int:
    """Smallest divisor of B giving >=128 projection rows, under a VMEM cap."""
    cap = 8 * 1024 * 1024  # cap on double-buffered activation blocks (4 operands)
    divisors = [d for d in range(1, B + 1) if B % d == 0]
    ok = [d for d in divisors if 2 * 4 * d * S * H * itemsize <= cap] or [1]
    for d in ok:
        if d * S >= 128:
            return d
    return ok[-1]


def multi_head_self_attention(q, k, v, wq_t, wk_t, wv_t, *, head: int,
                              block_b: int | None = None):
    """q,k,v: [B, S, H] ; wq_t/wk_t/wv_t: [H, H] (already transposed: x @ W)."""
    B, S, H = q.shape
    assert H % head == 0
    d_k = H // head

    itemsize = jnp.dtype(q.dtype).itemsize
    if block_b is None:
        block_b = _pick_block_b(B, S, H, itemsize)
    assert B % block_b == 0

    kernel = functools.partial(_mhsa_kernel, head=head, d_k=d_k)

    qkv_spec = pl.BlockSpec((block_b, S, H), lambda b: (b, 0, 0))
    # Constant index_map: weights are fetched once and reused across the grid.
    w_spec = pl.BlockSpec((H, H), lambda b: (0, 0))

    # Advisory cost estimate for XLA scheduling around the custom call.
    flops = 3 * 2 * B * S * H * H + 4 * B * S * S * H
    transcendentals = B * head * S * S
    bytes_accessed = 4 * B * S * H * itemsize + 3 * H * H * itemsize
    cost = pl.CostEstimate(flops=flops, transcendentals=transcendentals,
                           bytes_accessed=bytes_accessed)

    # Explicit VMEM budget (re-derived so blocks also fit v7x's 64 MiB VMEM).
    block_bytes = block_b * S * H * itemsize
    weight_bytes = H * H * itemsize
    need = (2 * 4 * block_bytes          # double-buffered q/k/v/o blocks
            + 2 * 3 * weight_bytes       # weight buffers
            + 8 * block_bytes            # in-kernel projections / head outputs
            + 4 * block_b * S * S * 4)   # score / prob intermediates
    vmem_limit = int(min(max(2 * need, 16 * 1024 * 1024), 48 * 1024 * 1024))

    return pl.pallas_call(
        kernel,
        out_shape=jax.ShapeDtypeStruct((B, S, H), q.dtype),
        grid_spec=pltpu.PrefetchScalarGridSpec(
            num_scalar_prefetch=0,
            grid=(B // block_b,),
            in_specs=[qkv_spec, qkv_spec, qkv_spec, w_spec, w_spec, w_spec],
            out_specs=pl.BlockSpec((block_b, S, H), lambda b: (b, 0, 0)),
        ),
        compiler_params=pltpu.CompilerParams(
            dimension_semantics=("parallel",),
            vmem_limit_bytes=vmem_limit,
        ),
        cost_estimate=cost,
    )(q, k, v, wq_t, wk_t, wv_t)


def _reference(q, k, v, wq_t, wk_t, wv_t, head):
    """Pure-JAX reference mirroring the PyTorch module (mask=None, dropout=0)."""
    B, S, H = q.shape
    d_k = H // head
    qp = jax.nn.relu(q @ wq_t).reshape(B, S, head, d_k).transpose(0, 2, 1, 3)
    kp = (k @ wk_t).reshape(B, S, head, d_k).transpose(0, 2, 1, 3)
    vp = (v @ wv_t).reshape(B, S, head, d_k).transpose(0, 2, 1, 3)
    scores = jnp.einsum("bhqd,bhkd->bhqk", qp, kp) / math.sqrt(d_k)
    probs = jax.nn.softmax(scores, axis=-1)
    out = jnp.einsum("bhqk,bhkd->bhqd", probs, vp)
    return out.transpose(0, 2, 1, 3).reshape(B, S, H)


if __name__ == "__main__":
    B, S, H, HEAD = 2, 8, 32, 4

    key = jax.random.PRNGKey(0)
    kq, kk, kv, kwq, kwk, kwv = jax.random.split(key, 6)

    q = jax.random.normal(kq, (B, S, H), dtype=jnp.float32)
    k = jax.random.normal(kk, (B, S, H), dtype=jnp.float32)
    v = jax.random.normal(kv, (B, S, H), dtype=jnp.float32)

    # Deterministic "Linear" weights (PyTorch weight is [out,in]; we store W^T).
    bound = 1.0 / math.sqrt(H)
    wq_t = jax.random.uniform(kwq, (H, H), jnp.float32, -bound, bound)
    wk_t = jax.random.uniform(kwk, (H, H), jnp.float32, -bound, bound)
    wv_t = jax.random.uniform(kwv, (H, H), jnp.float32, -bound, bound)

    out = multi_head_self_attention(q, k, v, wq_t, wk_t, wv_t, head=HEAD)
    out = jax.block_until_ready(out)

    ref = _reference(q, k, v, wq_t, wk_t, wv_t, HEAD)
    assert out.shape == (B, S, H)
    assert jnp.allclose(out, ref, atol=2e-4, rtol=2e-4), "mismatch vs reference"

    print("KERNEL_OK")
</pallas_src>

<mosaic_0001>
module attributes {stable_mosaic.version = 11 : i64} {
  func.func @_mhsa_kernel(%arg0: i32, %arg1: memref<2x8x32xf32, #tpu.memory_space<vmem>>, %arg2: memref<2x8x32xf32, #tpu.memory_space<vmem>>, %arg3: memref<2x8x32xf32, #tpu.memory_space<vmem>>, %arg4: memref<32x32xf32, #tpu.memory_space<vmem>>, %arg5: memref<32x32xf32, #tpu.memory_space<vmem>>, %arg6: memref<32x32xf32, #tpu.memory_space<vmem>>, %arg7: memref<2x8x32xf32, #tpu.memory_space<vmem>>) attributes {dimension_semantics = [#tpu.dimension_semantics<parallel>], iteration_bounds = array<i64: 1>, scalar_prefetch = 0 : i64, scratch_operands = 0 : i64, tpu.core_type = #tpu.core_type<tc>, window_params = [{transform_indices = @transform_0, window_bounds = array<i64: 2, 8, 32>}, {transform_indices = @transform_1, window_bounds = array<i64: 2, 8, 32>}, {transform_indices = @transform_2, window_bounds = array<i64: 2, 8, 32>}, {pipeline_mode = #tpu.pipeline_mode<synchronous>, transform_indices = @transform_3, window_bounds = array<i64: 32, 32>}, {pipeline_mode = #tpu.pipeline_mode<synchronous>, transform_indices = @transform_4, window_bounds = array<i64: 32, 32>}, {pipeline_mode = #tpu.pipeline_mode<synchronous>, transform_indices = @transform_5, window_bounds = array<i64: 32, 32>}, {transform_indices = @transform_6, window_bounds = array<i64: 2, 8, 32>}]} {
    %c0 = arith.constant 0 : index
    %c0_0 = arith.constant 0 : index
    %c0_1 = arith.constant 0 : index
    %0 = vector.load %arg1[%c0, %c0_0, %c0_1] : memref<2x8x32xf32, #tpu.memory_space<vmem>>, vector<2x8x32xf32>
    %1 = vector.shape_cast %0 : vector<2x8x32xf32> to vector<16x32xf32>
    %c0_2 = arith.constant 0 : index
    %c0_3 = arith.constant 0 : index
    %c0_4 = arith.constant 0 : index
    %2 = vector.load %arg2[%c0_2, %c0_3, %c0_4] : memref<2x8x32xf32, #tpu.memory_space<vmem>>, vector<2x8x32xf32>
    %3 = vector.shape_cast %2 : vector<2x8x32xf32> to vector<16x32xf32>
    %c0_5 = arith.constant 0 : index
    %c0_6 = arith.constant 0 : index
    %c0_7 = arith.constant 0 : index
    %4 = vector.load %arg3[%c0_5, %c0_6, %c0_7] : memref<2x8x32xf32, #tpu.memory_space<vmem>>, vector<2x8x32xf32>
    %5 = vector.shape_cast %4 : vector<2x8x32xf32> to vector<16x32xf32>
    %c0_8 = arith.constant 0 : index
    %c0_9 = arith.constant 0 : index
    %6 = vector.load %arg4[%c0_8, %c0_9] : memref<32x32xf32, #tpu.memory_space<vmem>>, vector<32x32xf32>
    %cst = arith.constant dense<0.000000e+00> : vector<16x32xf32>
    %7 = tpu.matmul %1, %6, %cst {dimension_numbers = #tpu.dot_dimension_numbers<[1], [0], [0], [1], [0, 0, 1, 1], [], []>} : vector<16x32xf32>, vector<32x32xf32>, vector<16x32xf32> -> vector<16x32xf32>
    %cst_10 = arith.constant 0.000000e+00 : f32
    %8 = vector.broadcast %cst_10 : f32 to vector<16x32xf32>
    %9 = arith.maximumf %7, %8 : vector<16x32xf32>
    %c0_11 = arith.constant 0 : index
    %c0_12 = arith.constant 0 : index
    %10 = vector.load %arg5[%c0_11, %c0_12] : memref<32x32xf32, #tpu.memory_space<vmem>>, vector<32x32xf32>
    %cst_13 = arith.constant dense<0.000000e+00> : vector<16x32xf32>
    %11 = tpu.matmul %3, %10, %cst_13 {dimension_numbers = #tpu.dot_dimension_numbers<[1], [0], [0], [1], [0, 0, 1, 1], [], []>} : vector<16x32xf32>, vector<32x32xf32>, vector<16x32xf32> -> vector<16x32xf32>
    %c0_14 = arith.constant 0 : index
    %c0_15 = arith.constant 0 : index
    %12 = vector.load %arg6[%c0_14, %c0_15] : memref<32x32xf32, #tpu.memory_space<vmem>>, vector<32x32xf32>
    %cst_16 = arith.constant dense<0.000000e+00> : vector<16x32xf32>
    %13 = tpu.matmul %5, %12, %cst_16 {dimension_numbers = #tpu.dot_dimension_numbers<[1], [0], [0], [1], [0, 0, 1, 1], [], []>} : vector<16x32xf32>, vector<32x32xf32>, vector<16x32xf32> -> vector<16x32xf32>
    %14 = vector.shape_cast %9 : vector<16x32xf32> to vector<2x8x32xf32>
    %15 = vector.shape_cast %11 : vector<16x32xf32> to vector<2x8x32xf32>
    %16 = vector.shape_cast %13 : vector<16x32xf32> to vector<2x8x32xf32>
    %17 = vector.extract_strided_slice %14 {offsets = [0, 0, 0], sizes = [2, 8, 8], strides = [1, 1, 1]} : vector<2x8x32xf32> to vector<2x8x8xf32>
    %cst_17 = arith.constant 0.353553385 : f32
    %18 = vector.broadcast %cst_17 : f32 to vector<2x8x8xf32>
    %19 = arith.mulf %17, %18 : vector<2x8x8xf32>
    %20 = vector.extract_strided_slice %15 {offsets = [0, 0, 0], sizes = [2, 8, 8], strides = [1, 1, 1]} : vector<2x8x32xf32> to vector<2x8x8xf32>
    %21 = vector.extract_strided_slice %16 {offsets = [0, 0, 0], sizes = [2, 8, 8], strides = [1, 1, 1]} : vector<2x8x32xf32> to vector<2x8x8xf32>
    "tpu.trace_start"() <{level = 10 : i32, message = "bqd,bkd->bqk"}> : () -> ()
    %cst_18 = arith.constant dense<0.000000e+00> : vector<2x8x8xf32>
    %22 = tpu.matmul %19, %20, %cst_18 {dimension_numbers = #tpu.dot_dimension_numbers<[2], [2], [1], [1], [0, 0, 0, 1, 1, 1], [0], [0]>} : vector<2x8x8xf32>, vector<2x8x8xf32>, vector<2x8x8xf32> -> vector<2x8x8xf32>
    "tpu.trace_stop"() : () -> ()
    %cst_19 = arith.constant dense<0xFF800000> : vector<2x8xf32>
    %23 = vector.multi_reduction <maximumf>, %22, %cst_19 [2] : vector<2x8x8xf32> to vector<2x8xf32>
    %24 = vector.shape_cast %23 : vector<2x8xf32> to vector<2x8x1xf32>
    %25 = vector.broadcast %24 : vector<2x8x1xf32> to vector<2x8x8xf32>
    %26 = arith.subf %22, %25 : vector<2x8x8xf32>
    %27 = math.exp %26 : vector<2x8x8xf32>
    %cst_20 = arith.constant dense<0.000000e+00> : vector<2x8xf32>
    %28 = vector.multi_reduction <add>, %27, %cst_20 [2] : vector<2x8x8xf32> to vector<2x8xf32>
    %29 = vector.shape_cast %28 : vector<2x8xf32> to vector<2x8x1xf32>
    %30 = tpu.reciprocal %29 {approx = true} : vector<2x8x1xf32> -> vector<2x8x1xf32>
    %31 = arith.mulf %29, %30 : vector<2x8x1xf32>
    %cst_21 = arith.constant 2.000000e+00 : f32
    %32 = vector.broadcast %cst_21 : f32 to vector<2x8x1xf32>
    %33 = arith.subf %32, %31 : vector<2x8x1xf32>
    %34 = arith.mulf %30, %33 : vector<2x8x1xf32>
    "tpu.trace_start"() <{level = 10 : i32, message = "bqk,bkd->bqd"}> : () -> ()
    %cst_22 = arith.constant dense<0.000000e+00> : vector<2x8x8xf32>
    %35 = tpu.matmul %27, %21, %cst_22 {dimension_numbers = #tpu.dot_dimension_numbers<[2], [1], [1], [2], [0, 0, 0, 1, 1, 2], [0], [0]>} : vector<2x8x8xf32>, vector<2x8x8xf32>, vector<2x8x8xf32> -> vector<2x8x8xf32>
    "tpu.trace_stop"() : () -> ()
    %36 = vector.broadcast %34 : vector<2x8x1xf32> to vector<2x8x8xf32>
    %37 = arith.mulf %35, %36 : vector<2x8x8xf32>
    %38 = vector.extract_strided_slice %14 {offsets = [0, 0, 8], sizes = [2, 8, 8], strides = [1, 1, 1]} : vector<2x8x32xf32> to vector<2x8x8xf32>
    %cst_23 = arith.constant 0.353553385 : f32
    %39 = vector.broadcast %cst_23 : f32 to vector<2x8x8xf32>
    %40 = arith.mulf %38, %39 : vector<2x8x8xf32>
    %41 = vector.extract_strided_slice %15 {offsets = [0, 0, 8], sizes = [2, 8, 8], strides = [1, 1, 1]} : vector<2x8x32xf32> to vector<2x8x8xf32>
    %42 = vector.extract_strided_slice %16 {offsets = [0, 0, 8], sizes = [2, 8, 8], strides = [1, 1, 1]} : vector<2x8x32xf32> to vector<2x8x8xf32>
    "tpu.trace_start"() <{level = 10 : i32, message = "bqd,bkd->bqk"}> : () -> ()
    %cst_24 = arith.constant dense<0.000000e+00> : vector<2x8x8xf32>
    %43 = tpu.matmul %40, %41, %cst_24 {dimension_numbers = #tpu.dot_dimension_numbers<[2], [2], [1], [1], [0, 0, 0, 1, 1, 1], [0], [0]>} : vector<2x8x8xf32>, vector<2x8x8xf32>, vector<2x8x8xf32> -> vector<2x8x8xf32>
    "tpu.trace_stop"() : () -> ()
    %cst_25 = arith.constant dense<0xFF800000> : vector<2x8xf32>
    %44 = vector.multi_reduction <maximumf>, %43, %cst_25 [2] : vector<2x8x8xf32> to vector<2x8xf32>
    %45 = vector.shape_cast %44 : vector<2x8xf32> to vector<2x8x1xf32>
    %46 = vector.broadcast %45 : vector<2x8x1xf32> to vector<2x8x8xf32>
    %47 = arith.subf %43, %46 : vector<2x8x8xf32>
    %48 = math.exp %47 : vector<2x8x8xf32>
    %cst_26 = arith.constant dense<0.000000e+00> : vector<2x8xf32>
    %49 = vector.multi_reduction <add>, %48, %cst_26 [2] : vector<2x8x8xf32> to vector<2x8xf32>
    %50 = vector.shape_cast %49 : vector<2x8xf32> to vector<2x8x1xf32>
    %51 = tpu.reciprocal %50 {approx = true} : vector<2x8x1xf32> -> vector<2x8x1xf32>
    %52 = arith.mulf %50, %51 : vector<2x8x1xf32>
    %cst_27 = arith.constant 2.000000e+00 : f32
    %53 = vector.broadcast %cst_27 : f32 to vector<2x8x1xf32>
    %54 = arith.subf %53, %52 : vector<2x8x1xf32>
    %55 = arith.mulf %51, %54 : vector<2x8x1xf32>
    "tpu.trace_start"() <{level = 10 : i32, message = "bqk,bkd->bqd"}> : () -> ()
    %cst_28 = arith.constant dense<0.000000e+00> : vector<2x8x8xf32>
    %56 = tpu.matmul %48, %42, %cst_28 {dimension_numbers = #tpu.dot_dimension_numbers<[2], [1], [1], [2], [0, 0, 0, 1, 1, 2], [0], [0]>} : vector<2x8x8xf32>, vector<2x8x8xf32>, vector<2x8x8xf32> -> vector<2x8x8xf32>
    "tpu.trace_stop"() : () -> ()
    %57 = vector.broadcast %55 : vector<2x8x1xf32> to vector<2x8x8xf32>
    %58 = arith.mulf %56, %57 : vector<2x8x8xf32>
    %59 = vector.extract_strided_slice %14 {offsets = [0, 0, 16], sizes = [2, 8, 8], strides = [1, 1, 1]} : vector<2x8x32xf32> to vector<2x8x8xf32>
    %cst_29 = arith.constant 0.353553385 : f32
    %60 = vector.broadcast %cst_29 : f32 to vector<2x8x8xf32>
    %61 = arith.mulf %59, %60 : vector<2x8x8xf32>
    %62 = vector.extract_strided_slice %15 {offsets = [0, 0, 16], sizes = [2, 8, 8], strides = [1, 1, 1]} : vector<2x8x32xf32> to vector<2x8x8xf32>
    %63 = vector.extract_strided_slice %16 {offsets = [0, 0, 16], sizes = [2, 8, 8], strides = [1, 1, 1]} : vector<2x8x32xf32> to vector<2x8x8xf32>
    "tpu.trace_start"() <{level = 10 : i32, message = "bqd,bkd->bqk"}> : () -> ()
    %cst_30 = arith.constant dense<0.000000e+00> : vector<2x8x8xf32>
    %64 = tpu.matmul %61, %62, %cst_30 {dimension_numbers = #tpu.dot_dimension_numbers<[2], [2], [1], [1], [0, 0, 0, 1, 1, 1], [0], [0]>} : vector<2x8x8xf32>, vector<2x8x8xf32>, vector<2x8x8xf32> -> vector<2x8x8xf32>
    "tpu.trace_stop"() : () -> ()
    %cst_31 = arith.constant dense<0xFF800000> : vector<2x8xf32>
    %65 = vector.multi_reduction <maximumf>, %64, %cst_31 [2] : vector<2x8x8xf32> to vector<2x8xf32>
    %66 = vector.shape_cast %65 : vector<2x8xf32> to vector<2x8x1xf32>
    %67 = vector.broadcast %66 : vector<2x8x1xf32> to vector<2x8x8xf32>
    %68 = arith.subf %64, %67 : vector<2x8x8xf32>
    %69 = math.exp %68 : vector<2x8x8xf32>
    %cst_32 = arith.constant dense<0.000000e+00> : vector<2x8xf32>
    %70 = vector.multi_reduction <add>, %69, %cst_32 [2] : vector<2x8x8xf32> to vector<2x8xf32>
    %71 = vector.shape_cast %70 : vector<2x8xf32> to vector<2x8x1xf32>
    %72 = tpu.reciprocal %71 {approx = true} : vector<2x8x1xf32> -> vector<2x8x1xf32>
    %73 = arith.mulf %71, %72 : vector<2x8x1xf32>
    %cst_33 = arith.constant 2.000000e+00 : f32
    %74 = vector.broadcast %cst_33 : f32 to vector<2x8x1xf32>
    %75 = arith.subf %74, %73 : vector<2x8x1xf32>
    %76 = arith.mulf %72, %75 : vector<2x8x1xf32>
    "tpu.trace_start"() <{level = 10 : i32, message = "bqk,bkd->bqd"}> : () -> ()
    %cst_34 = arith.constant dense<0.000000e+00> : vector<2x8x8xf32>
    %77 = tpu.matmul %69, %63, %cst_34 {dimension_numbers = #tpu.dot_dimension_numbers<[2], [1], [1], [2], [0, 0, 0, 1, 1, 2], [0], [0]>} : vector<2x8x8xf32>, vector<2x8x8xf32>, vector<2x8x8xf32> -> vector<2x8x8xf32>
    "tpu.trace_stop"() : () -> ()
    %78 = vector.broadcast %76 : vector<2x8x1xf32> to vector<2x8x8xf32>
    %79 = arith.mulf %77, %78 : vector<2x8x8xf32>
    %80 = vector.extract_strided_slice %14 {offsets = [0, 0, 24], sizes = [2, 8, 8], strides = [1, 1, 1]} : vector<2x8x32xf32> to vector<2x8x8xf32>
    %cst_35 = arith.constant 0.353553385 : f32
    %81 = vector.broadcast %cst_35 : f32 to vector<2x8x8xf32>
    %82 = arith.mulf %80, %81 : vector<2x8x8xf32>
    %83 = vector.extract_strided_slice %15 {offsets = [0, 0, 24], sizes = [2, 8, 8], strides = [1, 1, 1]} : vector<2x8x32xf32> to vector<2x8x8xf32>
    %84 = vector.extract_strided_slice %16 {offsets = [0, 0, 24], sizes = [2, 8, 8], strides = [1, 1, 1]} : vector<2x8x32xf32> to vector<2x8x8xf32>
    "tpu.trace_start"() <{level = 10 : i32, message = "bqd,bkd->bqk"}> : () -> ()
    %cst_36 = arith.constant dense<0.000000e+00> : vector<2x8x8xf32>
    %85 = tpu.matmul %82, %83, %cst_36 {dimension_numbers = #tpu.dot_dimension_numbers<[2], [2], [1], [1], [0, 0, 0, 1, 1, 1], [0], [0]>} : vector<2x8x8xf32>, vector<2x8x8xf32>, vector<2x8x8xf32> -> vector<2x8x8xf32>
    "tpu.trace_stop"() : () -> ()
    %cst_37 = arith.constant dense<0xFF800000> : vector<2x8xf32>
    %86 = vector.multi_reduction <maximumf>, %85, %cst_37 [2] : vector<2x8x8xf32> to vector<2x8xf32>
    %87 = vector.shape_cast %86 : vector<2x8xf32> to vector<2x8x1xf32>
    %88 = vector.broadcast %87 : vector<2x8x1xf32> to vector<2x8x8xf32>
    %89 = arith.subf %85, %88 : vector<2x8x8xf32>
    %90 = math.exp %89 : vector<2x8x8xf32>
    %cst_38 = arith.constant dense<0.000000e+00> : vector<2x8xf32>
    %91 = vector.multi_reduction <add>, %90, %cst_38 [2] : vector<2x8x8xf32> to vector<2x8xf32>
    %92 = vector.shape_cast %91 : vector<2x8xf32> to vector<2x8x1xf32>
    %93 = tpu.reciprocal %92 {approx = true} : vector<2x8x1xf32> -> vector<2x8x1xf32>
    %94 = arith.mulf %92, %93 : vector<2x8x1xf32>
    %cst_39 = arith.constant 2.000000e+00 : f32
    %95 = vector.broadcast %cst_39 : f32 to vector<2x8x1xf32>
    %96 = arith.subf %95, %94 : vector<2x8x1xf32>
    %97 = arith.mulf %93, %96 : vector<2x8x1xf32>
    "tpu.trace_start"() <{level = 10 : i32, message = "bqk,bkd->bqd"}> : () -> ()
    %cst_40 = arith.constant dense<0.000000e+00> : vector<2x8x8xf32>
    %98 = tpu.matmul %90, %84, %cst_40 {dimension_numbers = #tpu.dot_dimension_numbers<[2], [1], [1], [2], [0, 0, 0, 1, 1, 2], [0], [0]>} : vector<2x8x8xf32>, vector<2x8x8xf32>, vector<2x8x8xf32> -> vector<2x8x8xf32>
    "tpu.trace_stop"() : () -> ()
    %99 = vector.broadcast %97 : vector<2x8x1xf32> to vector<2x8x8xf32>
    %100 = arith.mulf %98, %99 : vector<2x8x8xf32>
    %101 = tpu.concatenate %37, %58, %79, %100 in 2 : vector<2x8x8xf32>, vector<2x8x8xf32>, vector<2x8x8xf32>, vector<2x8x8xf32> -> vector<2x8x32xf32>
    %c0_41 = arith.constant 0 : index
    %c0_42 = arith.constant 0 : index
    %c0_43 = arith.constant 0 : index
    %102 = vector.load %arg7[%c0_41, %c0_42, %c0_43] : memref<2x8x32xf32, #tpu.memory_space<vmem>>, vector<2x8x32xf32>
    tpu.vector_store %arg7[%c0_41, %c0_42, %c0_43], %101 {strides = array<i32>} : memref<2x8x32xf32, #tpu.memory_space<vmem>>, vector<2x8x32xf32>,
    return
  }
  func.func @transform_0(%arg0: i32) -> (i32, i32, i32) {
    %c0_i32 = arith.constant 0 : i32
    %c0_i32_0 = arith.constant 0 : i32
    %c0_i32_1 = arith.constant 0 : i32
    return %arg0, %c0_i32, %c0_i32_0 : i32, i32, i32
  }
  func.func @transform_1(%arg0: i32) -> (i32, i32, i32) {
    %c0_i32 = arith.constant 0 : i32
    %c0_i32_0 = arith.constant 0 : i32
    %c0_i32_1 = arith.constant 0 : i32
    return %arg0, %c0_i32, %c0_i32_0 : i32, i32, i32
  }
  func.func @transform_2(%arg0: i32) -> (i32, i32, i32) {
    %c0_i32 = arith.constant 0 : i32
    %c0_i32_0 = arith.constant 0 : i32
    %c0_i32_1 = arith.constant 0 : i32
    return %arg0, %c0_i32, %c0_i32_0 : i32, i32, i32
  }
  func.func @transform_3(%arg0: i32) -> (i32, i32) {
    %c0_i32 = arith.constant 0 : i32
    %c0_i32_0 = arith.constant 0 : i32
    %c0_i32_1 = arith.constant 0 : i32
    return %c0_i32, %c0_i32_0 : i32, i32
  }
  func.func @transform_4(%arg0: i32) -> (i32, i32) {
    %c0_i32 = arith.constant 0 : i32
    %c0_i32_0 = arith.constant 0 : i32
    %c0_i32_1 = arith.constant 0 : i32
    return %c0_i32, %c0_i32_0 : i32, i32
  }
  func.func @transform_5(%arg0: i32) -> (i32, i32) {
    %c0_i32 = arith.constant 0 : i32
    %c0_i32_0 = arith.constant 0 : i32
    %c0_i32_1 = arith.constant 0 : i32
    return %c0_i32, %c0_i32_0 : i32, i32
  }
  func.func @transform_6(%arg0: i32) -> (i32, i32, i32) {
    %c0_i32 = arith.constant 0 : i32
    %c0_i32_0 = arith.constant 0 : i32
    %c0_i32_1 = arith.constant 0 : i32
    return %arg0, %c0_i32, %c0_i32_0 : i32, i32, i32
  }
}

</mosaic_0001>

<llo_original>
// kernel: tpu_custom_call.1
$region0: #{tpu_custom_call.1}
  #allocation0 [shape = 'u32[]', space=smem, size = 0x4, offset = 0x4, fixed_abs, tag = 'smem constant byte address 0x4 - core index']
  #allocation1 [shape = 'u32[144,128]{1,0:T(1,128)}', space=vmem, size = 0x12000, scoped, tag = 'internal scratch']
  %s0 = inlined_call_operand.hbm [shape: f32[2,8,32], index: 0, kind: input, shape index: {}]
  %s1 = inlined_call_operand.hbm [shape: f32[2,8,32], index: 1, kind: input, shape index: {}]
  %s2 = inlined_call_operand.hbm [shape: f32[2,8,32], index: 2, kind: input, shape index: {}]
  %s3 = inlined_call_operand.hbm [shape: f32[32,32], index: 3, kind: input, shape index: {}]
  %s4 = inlined_call_operand.hbm [shape: f32[32,32], index: 4, kind: input, shape index: {}]
  %s5 = inlined_call_operand.hbm [shape: f32[32,32], index: 5, kind: input, shape index: {}]
  %s6 = inlined_call_operand.hbm [shape: f32[2,8,32], index: 6, kind: output, shape index: {}]
  %s7 = sld [smem:[#allocation0]]
  $region58: #{tpu_custom_call.1} parent=0
    _
  %s9 = ssub.s32 1, %s7
  %s10 = scalar_select 0, %s9, %s7
  $region1: #{tpu_custom_call.1} parent=0
    #allocation2 [shape = 'u8[8192]{0}', space=vmem, size = 0x2000, scoped, tag = 'input window, operand 0, single buffered']
    #allocation3 [shape = 's32[1]{0}', space=sflag, size = 0x4, scoped, tag = 'scoped memory for tpu_custom_call.1']
    #allocation4 [shape = 's32[1]{0}', space=sflag, size = 0x4, scoped, tag = 'scoped memory for tpu_custom_call.1']
    #allocation5 [shape = 'u8[8192]{0}', space=vmem, size = 0x2000, scoped, tag = 'input window, operand 1, single buffered']
    #allocation6 [shape = 's32[1]{0}', space=sflag, size = 0x4, scoped, tag = 'scoped memory for tpu_custom_call.1']
    #allocation7 [shape = 'u8[8192]{0}', space=vmem, size = 0x2000, scoped, tag = 'input window, operand 2, single buffered']
    #allocation8 [shape = 'u8[16384]{0}', space=vmem, size = 0x4000, scoped, tag = 'input window, operand 3, single buffered']
    #allocation9 [shape = 's32[1]{0}', space=sflag, size = 0x4, scoped, tag = 'scoped memory for tpu_custom_call.1']
    #allocation10 [shape = 'u8[16384]{0}', space=vmem, size = 0x4000, scoped, tag = 'input window, operand 4, single buffered']
    #allocation11 [shape = 'u8[16384]{0}', space=vmem, size = 0x4000, scoped, tag = 'input window, operand 5, single buffered']
    #allocation12 [shape = 's32[1]{0}', space=sflag, size = 0x4, scoped, tag = 'scoped memory for tpu_custom_call.1']
    #allocation13 [shape = 'u8[8192]{0}', space=vmem, size = 0x2000, scoped, tag = 'output window, operand 0, single buffered']
    %11 = vsyncpa [#allocation3], 0
    %12 = vsyncpa [#allocation6], 0
    %13 = vsyncpa [#allocation9], 0
    %14 = vsyncpa [#allocation12], 0
    %15 = vsyncpa [#allocation4], 0
    // Predicated region
    $region2: #{tpu_custom_call.1} parent=1 // pred_check
      _
    $region3: #{tpu_custom_call.1} parent=1 // pred_check_branch
      %17 = sbr.rel (0) target = $region5
    $region4: #{tpu_custom_call.1} parent=1 // pred_region
      %s19 = ssub.s32 256, 256
      %20 = vsyncadd [#allocation3], %s19
      %s21 = sshll.u32 [#allocation2], 4
      %s22 = int_to_ptr.vmem [resolvable:$true] %s21
      %27 = dma.hbm_to_vmem [thread:$0]  %s0, 256, %s22, [#allocation3], 128, 128, 8
    $region5: #{tpu_custom_call.1} parent=1 // pred_fallthru
      _
    // Predicated region
    $region6: #{tpu_custom_call.1} parent=1 // pred_check
      _
    $region7: #{tpu_custom_call.1} parent=1 // pred_check_branch
      %29 = sbr.rel (0) target = $region9
    $region8: #{tpu_custom_call.1} parent=1 // pred_region
      %s31 = ssub.s32 256, 256
      %32 = vsyncadd [#allocation6], %s31
      %s33 = sshll.u32 [#allocation5], 4
      %s34 = int_to_ptr.vmem [resolvable:$true] %s33
      %39 = dma.hbm_to_vmem [thread:$0]  %s1, 256, %s34, [#allocation6], 128, 128, 8
    $region9: #{tpu_custom_call.1} parent=1 // pred_fallthru
      _
    // Predicated region
    $region10: #{tpu_custom_call.1} parent=1 // pred_check
      _
    $region11: #{tpu_custom_call.1} parent=1 // pred_check_branch
      %41 = sbr.rel (0) target = $region13
    $region12: #{tpu_custom_call.1} parent=1 // pred_region
      %s43 = ssub.s32 256, 256
      %44 = vsyncadd [#allocation6], %s43
      %s45 = sshll.u32 [#allocation7], 4
      %s46 = int_to_ptr.vmem [resolvable:$true] %s45
      %51 = dma.hbm_to_vmem [thread:$0]  %s2, 256, %s46, [#allocation6], 128, 128, 8
    $region13: #{tpu_custom_call.1} parent=1 // pred_fallthru
      _
    // Predicated region
    $region14: #{tpu_custom_call.1} parent=1 // pred_check
      _
    $region15: #{tpu_custom_call.1} parent=1 // pred_check_branch
      %53 = sbr.rel (0) target = $region17
    $region16: #{tpu_custom_call.1} parent=1 // pred_region
      %s55 = ssub.s32 512, 512
      %56 = vsyncadd [#allocation9], %s55
      %s57 = sshll.u32 [#allocation8], 4
      %s58 = int_to_ptr.vmem [resolvable:$true] %s57
      %63 = dma.hbm_to_vmem [thread:$0]  %s3, 512, %s58, [#allocation9], 128, 128, 8
    $region17: #{tpu_custom_call.1} parent=1 // pred_fallthru
      _
    // Predicated region
    $region18: #{tpu_custom_call.1} parent=1 // pred_check
      _
    $region19: #{tpu_custom_call.1} parent=1 // pred_check_branch
      %65 = sbr.rel (0) target = $region21
    $region20: #{tpu_custom_call.1} parent=1 // pred_region
      %s67 = ssub.s32 512, 512
      %68 = vsyncadd [#allocation9], %s67
      %s69 = sshll.u32 [#allocation10], 4
      %s70 = int_to_ptr.vmem [resolvable:$true] %s69
      %75 = dma.hbm_to_vmem [thread:$0]  %s4, 512, %s70, [#allocation9], 128, 128, 8
    $region21: #{tpu_custom_call.1} parent=1 // pred_fallthru
      _
    // Predicated region
    $region22: #{tpu_custom_call.1} parent=1 // pred_check
      _
    $region23: #{tpu_custom_call.1} parent=1 // pred_check_branch
      %77 = sbr.rel (0) target = $region25
    $region24: #{tpu_custom_call.1} parent=1 // pred_region
      %s79 = ssub.s32 512, 512
      %80 = vsyncadd [#allocation12], %s79
      %s81 = sshll.u32 [#allocation11], 4
      %s82 = int_to_ptr.vmem [resolvable:$true] %s81
      %87 = dma.hbm_to_vmem [thread:$0]  %s5, 512, %s82, [#allocation12], 128, 128, 8
    $region25: #{tpu_custom_call.1} parent=1 // pred_fallthru
      _
    // Predicated region
    $region26: #{tpu_custom_call.1} parent=1 // pred_check
      _
    $region27: #{tpu_custom_call.1} parent=1 // pred_check_branch
      %89 = sbr.rel (0) target = $region29
    $region28: #{tpu_custom_call.1} parent=1 // pred_region
      %90 = dma.done [#allocation3], 256
    $region29: #{tpu_custom_call.1} parent=1 // pred_fallthru
      _
    // Predicated region
    $region30: #{tpu_custom_call.1} parent=1 // pred_check
      _
    $region31: #{tpu_custom_call.1} parent=1 // pred_check_branch
      %92 = sbr.rel (0) target = $region33
    $region32: #{tpu_custom_call.1} parent=1 // pred_region
      %93 = dma.done [#allocation6], 256
    $region33: #{tpu_custom_call.1} parent=1 // pred_fallthru
      _
    // Predicated region
    $region34: #{tpu_custom_call.1} parent=1 // pred_check
      _
    $region35: #{tpu_custom_call.1} parent=1 // pred_check_branch
      %95 = sbr.rel (0) target = $region37
    $region36: #{tpu_custom_call.1} parent=1 // pred_region
      %96 = dma.done [#allocation6], 256
    $region37: #{tpu_custom_call.1} parent=1 // pred_fallthru
      _
    // Predicated region
    $region38: #{tpu_custom_call.1} parent=1 // pred_check
      _
    $region39: #{tpu_custom_call.1} parent=1 // pred_check_branch
      %98 = sbr.rel (0) target = $region41
    $region40: #{tpu_custom_call.1} parent=1 // pred_region
      %99 = dma.done [#allocation9], 512
    $region41: #{tpu_custom_call.1} parent=1 // pred_fallthru
      _
    // Predicated region
    $region42: #{tpu_custom_call.1} parent=1 // pred_check
      _
    $region43: #{tpu_custom_call.1} parent=1 // pred_check_branch
      %101 = sbr.rel (0) target = $region45
    $region44: #{tpu_custom_call.1} parent=1 // pred_region
      %102 = dma.done [#allocation9], 512
    $region45: #{tpu_custom_call.1} parent=1 // pred_fallthru
      _
    // Predicated region
    $region46: #{tpu_custom_call.1} parent=1 // pred_check
      _
    $region47: #{tpu_custom_call.1} parent=1 // pred_check_branch
      %104 = sbr.rel (0) target = $region49
    $region48: #{tpu_custom_call.1} parent=1 // pred_region
      %105 = dma.done [#allocation12], 512
    $region49: #{tpu_custom_call.1} parent=1 // pred_fallthru
      _
    %v106 = vld [vmem:[#allocation2] sm:$0xff]
    %v107 = vld [vmem:[#allocation2 + $0x8] sm:$0xff]
    %v108 = vld [vmem:[#allocation5] sm:$0xff]
    %v109 = vld [vmem:[#allocation5 + $0x8] sm:$0xff]
    %v110 = vld [vmem:[#allocation7] sm:$0xff]
    %v111 = vld [vmem:[#allocation7 + $0x8] sm:$0xff]
    %v112 = vld [vmem:[#allocation8] sm:$0xff]
    %v113 = vld [vmem:[#allocation8 + $0x8] sm:$0xff]
    %v114 = vld [vmem:[#allocation8 + $0x10] sm:$0xff]
    %v115 = vld [vmem:[#allocation8 + $0x18] sm:$0xff]
    %vm116 = vcmask 261120
    %v118 = vsel %vm116, %v106, 0
    %v121 = vsel %vm116, %v107, 0
    %123 = vmatprep.subr.mxu0 0.0
    %124 = vmatpush1.msra.mxu0 %v112
    %125 = vmatprep.subr.mxu0 0.0
    %126 = vmatpush1.msra.mxu0 %v113
    %127 = vmatprep.subr.mxu0 0.0
    %128 = vmatpush1.msra.mxu0 %v114
    %129 = vmatprep.subr.mxu0 0.0
    %130 = vmatpush1.msra.mxu0 %v115
    %131 = vmatprep.subr.mxu0 0.0
    %132 = vmatpush1.msra.mxu0 0.0
    %133 = vmatprep.subr.mxu0 0.0
    %134 = vmatpush1.msra.mxu0 0.0
    %135 = vmatprep.subr.mxu0 0.0
    %136 = vmatpush1.msra.mxu0 0.0
    %137 = vmatprep.subr.mxu0 0.0
    %138 = vmatpush1.msra.mxu0 0.0
    %139 = vmatprep.subr.mxu0 0.0
    %140 = vmatpush1.msra.mxu0 0.0
    %141 = vmatprep.subr.mxu0 0.0
    %142 = vmatpush1.msra.mxu0 0.0
    %143 = vmatprep.subr.mxu0 0.0
    %144 = vmatpush1.msra.mxu0 0.0
    %145 = vmatprep.subr.mxu0 0.0
    %146 = vmatpush1.msra.mxu0 0.0
    %147 = vmatprep.subr.mxu0 0.0
    %148 = vmatpush1.msra.mxu0 0.0
    %149 = vmatprep.subr.mxu0 0.0
    %150 = vmatpush1.msra.mxu0 0.0
    %151 = vmatprep.subr.mxu0 0.0
    %152 = vmatpush1.msra.mxu0 0.0
    %153 = vmatprep.subr.mxu0 0.0
    %154 = vmatpush1.msra.mxu0 0.0
    %155 = vmatprep.subr.mxu0 0.0
    %156 = vmatpush1.msra.mxu0 0.0
    %157 = vmatprep.subr.mxu0 0.0
    %158 = vmatpush1.msra.mxu0 0.0
    %159 = vmatprep.subr.mxu0 0.0
    %160 = vmatpush1.msra.mxu0 0.0
    %161 = vmatprep.subr.mxu0 0.0
    %162 = vmatpush1.msra.mxu0 0.0
    %163 = vmatprep.subr.mxu0 0.0
    %164 = vmatpush1.msra.mxu0 0.0
    %165 = vmatprep.subr.mxu0 0.0
    %166 = vmatpush1.msra.mxu0 0.0
    %167 = vmatprep.subr.mxu0 0.0
    %168 = vmatpush1.msra.mxu0 0.0
    %169 = vmatprep.subr.mxu0 0.0
    %170 = vmatpush1.msra.mxu0 0.0
    %171 = vmatprep.subr.mxu0 0.0
    %172 = vmatpush1.msra.mxu0 0.0
    %173 = vmatprep.subr.mxu0 0.0
    %174 = vmatpush1.msra.mxu0 0.0
    %175 = vmatprep.subr.mxu0 0.0
    %176 = vmatpush1.msra.mxu0 0.0
    %177 = vmatprep.subr.mxu0 0.0
    %178 = vmatpush1.msra.mxu0 0.0
    %179 = vmatprep.subr.mxu0 0.0
    %180 = vmatpush1.msra.mxu0 0.0
    %181 = vmatprep.subr.mxu0 0.0
    %182 = vmatpush1.msra.mxu0 0.0
    %183 = vmatprep.subr.mxu0 0.0
    %184 = vmatpush1.msra.mxu0 0.0
    %185 = vmatprep.subr.mxu0 0.0
    %186 = vmatpush1.msra.mxu0 0.0
    %187 = vmatprep.mubr.f32.mxu0 0.0
    %188 = vmatmul.mubr.f32.gmra.mrb[0].mxu0 %v118
    %v189 = vpop.f32.mrb[0].mxu0
    %v190 = vadd.f32 0.0, %v189
    %v191 = vpop.f32.mrb[0].mxu0
    %192 = vmatprep.mubr.f32.mxu0 0.0
    %193 = vmatmul.mubr.f32.gmra.mrb[0].mxu0 %v121
    %v194 = vpop.f32.mrb[0].mxu0
    %v195 = vadd.f32 0.0, %v194
    %v196 = vpop.f32.mrb[0].mxu0
    %197 = vdwg.mxu0
    %v198 = vmax.f32 %v190, 0.0
    %v199 = vmax.f32 %v195, 0.0
    %v200 = vld [vmem:[#allocation10] sm:$0xff]
    %v201 = vld [vmem:[#allocation10 + $0x8] sm:$0xff]
    %v202 = vld [vmem:[#allocation10 + $0x10] sm:$0xff]
    %v203 = vld [vmem:[#allocation10 + $0x18] sm:$0xff]
    %v205 = vsel %vm116, %v108, 0
    %v208 = vsel %vm116, %v109, 0
    %210 = vmatprep.subr.mxu0 0.0
    %211 = vmatpush1.msra.mxu0 %v200
    %212 = vmatprep.subr.mxu0 0.0
    %213 = vmatpush1.msra.mxu0 %v201
    %214 = vmatprep.subr.mxu0 0.0
    %215 = vmatpush1.msra.mxu0 %v202
    %216 = vmatprep.subr.mxu0 0.0
    %217 = vmatpush1.msra.mxu0 %v203
    %218 = vmatprep.subr.mxu0 0.0
    %219 = vmatpush1.msra.mxu0 0.0
    %220 = vmatprep.subr.mxu0 0.0
    %221 = vmatpush1.msra.mxu0 0.0
    %222 = vmatprep.subr.mxu0 0.0
    %223 = vmatpush1.msra.mxu0 0.0
    %224 = vmatprep.subr.mxu0 0.0
    %225 = vmatpush1.msra.mxu0 0.0
    %226 = vmatprep.subr.mxu0 0.0
    %227 = vmatpush1.msra.mxu0 0.0
    %228 = vmatprep.subr.mxu0 0.0
    %229 = vmatpush1.msra.mxu0 0.0
    %230 = vmatprep.subr.mxu0 0.0
    %231 = vmatpush1.msra.mxu0 0.0
    %232 = vmatprep.subr.mxu0 0.0
    %233 = vmatpush1.msra.mxu0 0.0
    %234 = vmatprep.subr.mxu0 0.0
    %235 = vmatpush1.msra.mxu0 0.0
    %236 = vmatprep.subr.mxu0 0.0
    %237 = vmatpush1.msra.mxu0 0.0
    %238 = vmatprep.subr.mxu0 0.0
    %239 = vmatpush1.msra.mxu0 0.0
    %240 = vmatprep.subr.mxu0 0.0
    %241 = vmatpush1.msra.mxu0 0.0
    %242 = vmatprep.subr.mxu0 0.0
    %243 = vmatpush1.msra.mxu0 0.0
    %244 = vmatprep.subr.mxu0 0.0
    %245 = vmatpush1.msra.mxu0 0.0
    %246 = vmatprep.subr.mxu0 0.0
    %247 = vmatpush1.msra.mxu0 0.0
    %248 = vmatprep.subr.mxu0 0.0
    %249 = vmatpush1.msra.mxu0 0.0
    %250 = vmatprep.subr.mxu0 0.0
    %251 = vmatpush1.msra.mxu0 0.0
    %252 = vmatprep.subr.mxu0 0.0
    %253 = vmatpush1.msra.mxu0 0.0
    %254 = vmatprep.subr.mxu0 0.0
    %255 = vmatpush1.msra.mxu0 0.0
    %256 = vmatprep.subr.mxu0 0.0
    %257 = vmatpush1.msra.mxu0 0.0
    %258 = vmatprep.subr.mxu0 0.0
    %259 = vmatpush1.msra.mxu0 0.0
    %260 = vmatprep.subr.mxu0 0.0
    %261 = vmatpush1.msra.mxu0 0.0
    %262 = vmatprep.subr.mxu0 0.0
    %263 = vmatpush1.msra.mxu0 0.0
    %264 = vmatprep.subr.mxu0 0.0
    %265 = vmatpush1.msra.mxu0 0.0
    %266 = vmatprep.subr.mxu0 0.0
    %267 = vmatpush1.msra.mxu0 0.0
    %268 = vmatprep.subr.mxu0 0.0
    %269 = vmatpush1.msra.mxu0 0.0
    %270 = vmatprep.subr.mxu0 0.0
    %271 = vmatpush1.msra.mxu0 0.0
    %272 = vmatprep.subr.mxu0 0.0
    %273 = vmatpush1.msra.mxu0 0.0
    %274 = vmatprep.mubr.f32.mxu0 0.0
    %275 = vmatmul.mubr.f32.gmra.mrb[0].mxu0 %v205
    %v276 = vpop.f32.mrb[0].mxu0
    %v277 = vadd.f32 0.0, %v276
    %v278 = vpop.f32.mrb[0].mxu0
    %279 = vmatprep.mubr.f32.mxu0 0.0
    %280 = vmatmul.mubr.f32.gmra.mrb[0].mxu0 %v208
    %v281 = vpop.f32.mrb[0].mxu0
    %v282 = vadd.f32 0.0, %v281
    %v283 = vpop.f32.mrb[0].mxu0
    %284 = vdwg.mxu0
    %v285 = vld [vmem:[#allocation11] sm:$0xff]
    %v286 = vld [vmem:[#allocation11 + $0x8] sm:$0xff]
    %v287 = vld [vmem:[#allocation11 + $0x10] sm:$0xff]
    %v288 = vld [vmem:[#allocation11 + $0x18] sm:$0xff]
    %v290 = vsel %vm116, %v110, 0
    %v293 = vsel %vm116, %v111, 0
    %295 = vmatprep.subr.mxu0 0.0
    %296 = vmatpush1.msra.mxu0 %v285
    %297 = vmatprep.subr.mxu0 0.0
    %298 = vmatpush1.msra.mxu0 %v286
    %299 = vmatprep.subr.mxu0 0.0
    %300 = vmatpush1.msra.mxu0 %v287
    %301 = vmatprep.subr.mxu0 0.0
    %302 = vmatpush1.msra.mxu0 %v288
    %303 = vmatprep.subr.mxu0 0.0
    %304 = vmatpush1.msra.mxu0 0.0
    %305 = vmatprep.subr.mxu0 0.0
    %306 = vmatpush1.msra.mxu0 0.0
    %307 = vmatprep.subr.mxu0 0.0
    %308 = vmatpush1.msra.mxu0 0.0
    %309 = vmatprep.subr.mxu0 0.0
    %310 = vmatpush1.msra.mxu0 0.0
    %311 = vmatprep.subr.mxu0 0.0
    %312 = vmatpush1.msra.mxu0 0.0
    %313 = vmatprep.subr.mxu0 0.0
    %314 = vmatpush1.msra.mxu0 0.0
    %315 = vmatprep.subr.mxu0 0.0
    %316 = vmatpush1.msra.mxu0 0.0
    %317 = vmatprep.subr.mxu0 0.0
    %318 = vmatpush1.msra.mxu0 0.0
    %319 = vmatprep.subr.mxu0 0.0
    %320 = vmatpush1.msra.mxu0 0.0
    %321 = vmatprep.subr.mxu0 0.0
    %322 = vmatpush1.msra.mxu0 0.0
    %323 = vmatprep.subr.mxu0 0.0
    %324 = vmatpush1.msra.mxu0 0.0
    %325 = vmatprep.subr.mxu0 0.0
    %326 = vmatpush1.msra.mxu0 0.0
    %327 = vmatprep.subr.mxu0 0.0
    %328 = vmatpush1.msra.mxu0 0.0
    %329 = vmatprep.subr.mxu0 0.0
    %330 = vmatpush1.msra.mxu0 0.0
    %331 = vmatprep.subr.mxu0 0.0
    %332 = vmatpush1.msra.mxu0 0.0
    %333 = vmatprep.subr.mxu0 0.0
    %334 = vmatpush1.msra.mxu0 0.0
    %335 = vmatprep.subr.mxu0 0.0
    %336 = vmatpush1.msra.mxu0 0.0
    %337 = vmatprep.subr.mxu0 0.0
    %338 = vmatpush1.msra.mxu0 0.0
    %339 = vmatprep.subr.mxu0 0.0
    %340 = vmatpush1.msra.mxu0 0.0
    %341 = vmatprep.subr.mxu0 0.0
    %342 = vmatpush1.msra.mxu0 0.0
    %343 = vmatprep.subr.mxu0 0.0
    %344 = vmatpush1.msra.mxu0 0.0
    %345 = vmatprep.subr.mxu0 0.0
    %346 = vmatpush1.msra.mxu0 0.0
    %347 = vmatprep.subr.mxu0 0.0
    %348 = vmatpush1.msra.mxu0 0.0
    %349 = vmatprep.subr.mxu0 0.0
    %350 = vmatpush1.msra.mxu0 0.0
    %351 = vmatprep.subr.mxu0 0.0
    %352 = vmatpush1.msra.mxu0 0.0
    %353 = vmatprep.subr.mxu0 0.0
    %354 = vmatpush1.msra.mxu0 0.0
    %355 = vmatprep.subr.mxu0 0.0
    %356 = vmatpush1.msra.mxu0 0.0
    %357 = vmatprep.subr.mxu0 0.0
    %358 = vmatpush1.msra.mxu0 0.0
    %359 = vmatprep.mubr.f32.mxu0 0.0
    %360 = vmatmul.mubr.f32.gmra.mrb[0].mxu0 %v290
    %v361 = vpop.f32.mrb[0].mxu0
    %v362 = vadd.f32 0.0, %v361
    %v363 = vpop.f32.mrb[0].mxu0
    %364 = vmatprep.mubr.f32.mxu0 0.0
    %365 = vmatmul.mubr.f32.gmra.mrb[0].mxu0 %v293
    %v366 = vpop.f32.mrb[0].mxu0
    %v367 = vadd.f32 0.0, %v366
    %v368 = vpop.f32.mrb[0].mxu0
    %369 = vdwg.mxu0
    %v370 = vmul.f32 %v198, 0.35355338
    %v371 = vmul.f32 %v199, 0.35355338
    %vm372 = vcmask 64512
    %v374 = vsel %vm372, %v370, 0
    %v377 = vsel %vm372, %v277, 0
    %379 = vmatprep.subr.mxu0 0.0
    %380 = vmatpush1.xpose.msra.mxu0 %v377
    %381 = vmatprep.subr.mxu0 0.0
    %382 = vmatpush1.xpose.msra.mxu0 0.0
    %383 = vmatprep.subr.mxu0 0.0
    %384 = vmatpush1.xpose.msra.mxu0 0.0
    %385 = vmatprep.subr.mxu0 0.0
    %386 = vmatpush1.xpose.msra.mxu0 0.0
    %387 = vmatprep.subr.mxu0 0.0
    %388 = vmatpush1.xpose.msra.mxu0 0.0
    %389 = vmatprep.subr.mxu0 0.0
    %390 = vmatpush1.xpose.msra.mxu0 0.0
    %391 = vmatprep.subr.mxu0 0.0
    %392 = vmatpush1.xpose.msra.mxu0 0.0
    %393 = vmatprep.subr.mxu0 0.0
    %394 = vmatpush1.xpose.msra.mxu0 0.0
    %395 = vmatprep.subr.mxu0 0.0
    %396 = vmatpush1.xpose.msra.mxu0 0.0
    %397 = vmatprep.subr.mxu0 0.0
    %398 = vmatpush1.xpose.msra.mxu0 0.0
    %399 = vmatprep.subr.mxu0 0.0
    %400 = vmatpush1.xpose.msra.mxu0 0.0
    %401 = vmatprep.subr.mxu0 0.0
    %402 = vmatpush1.xpose.msra.mxu0 0.0
    %403 = vmatprep.subr.mxu0 0.0
    %404 = vmatpush1.xpose.msra.mxu0 0.0
    %405 = vmatprep.subr.mxu0 0.0
    %406 = vmatpush1.xpose.msra.mxu0 0.0
    %407 = vmatprep.subr.mxu0 0.0
    %408 = vmatpush1.xpose.msra.mxu0 0.0
    %409 = vmatprep.subr.mxu0 0.0
    %410 = vmatpush1.xpose.msra.mxu0 0.0
    %411 = vmatprep.subr.mxu0 0.0
    %412 = vmatpush1.xpose.msra.mxu0 0.0
    %413 = vmatprep.subr.mxu0 0.0
    %414 = vmatpush1.xpose.msra.mxu0 0.0
    %415 = vmatprep.subr.mxu0 0.0
    %416 = vmatpush1.xpose.msra.mxu0 0.0
    %417 = vmatprep.subr.mxu0 0.0
    %418 = vmatpush1.xpose.msra.mxu0 0.0
    %419 = vmatprep.subr.mxu0 0.0
    %420 = vmatpush1.xpose.msra.mxu0 0.0
    %421 = vmatprep.subr.mxu0 0.0
    %422 = vmatpush1.xpose.msra.mxu0 0.0
    %423 = vmatprep.subr.mxu0 0.0
    %424 = vmatpush1.xpose.msra.mxu0 0.0
    %425 = vmatprep.subr.mxu0 0.0
    %426 = vmatpush1.xpose.msra.mxu0 0.0
    %427 = vmatprep.subr.mxu0 0.0
    %428 = vmatpush1.xpose.msra.mxu0 0.0
    %429 = vmatprep.subr.mxu0 0.0
    %430 = vmatpush1.xpose.msra.mxu0 0.0
    %431 = vmatprep.subr.mxu0 0.0
    %432 = vmatpush1.xpose.msra.mxu0 0.0
    %433 = vmatprep.subr.mxu0 0.0
    %434 = vmatpush1.xpose.msra.mxu0 0.0
    %435 = vmatprep.subr.mxu0 0.0
    %436 = vmatpush1.xpose.msra.mxu0 0.0
    %437 = vmatprep.subr.mxu0 0.0
    %438 = vmatpush1.xpose.msra.mxu0 0.0
    %439 = vmatprep.subr.mxu0 0.0
    %440 = vmatpush1.xpose.msra.mxu0 0.0
    %441 = vmatprep.subr.mxu0 0.0
    %442 = vmatpush1.xpose.msra.mxu0 0.0
    %443 = vmatprep.mubr.f32.mxu0 0.0
    %444 = vmatmul.mubr.f32.gmra.mrb[0].mxu0 %v374
    %v445 = vpop.f32.mrb[0].mxu0
    %v446 = vadd.f32 0.0, %v445
    %v447 = vpop.f32.mrb[0].mxu0
    %448 = vdwg.mxu0
    %v450 = vsel %vm372, %v371, 0
    %v453 = vsel %vm372, %v282, 0
    %455 = vmatprep.subr.mxu0 0.0
    %456 = vmatpush1.xpose.msra.mxu0 %v453
    %457 = vmatprep.subr.mxu0 0.0
    %458 = vmatpush1.xpose.msra.mxu0 0.0
    %459 = vmatprep.subr.mxu0 0.0
    %460 = vmatpush1.xpose.msra.mxu0 0.0
    %461 = vmatprep.subr.mxu0 0.0
    %462 = vmatpush1.xpose.msra.mxu0 0.0
    %463 = vmatprep.subr.mxu0 0.0
    %464 = vmatpush1.xpose.msra.mxu0 0.0
    %465 = vmatprep.subr.mxu0 0.0
    %466 = vmatpush1.xpose.msra.mxu0 0.0
    %467 = vmatprep.subr.mxu0 0.0
    %468 = vmatpush1.xpose.msra.mxu0 0.0
    %469 = vmatprep.subr.mxu0 0.0
    %470 = vmatpush1.xpose.msra.mxu0 0.0
    %471 = vmatprep.subr.mxu0 0.0
    %472 = vmatpush1.xpose.msra.mxu0 0.0
    %473 = vmatprep.subr.mxu0 0.0
    %474 = vmatpush1.xpose.msra.mxu0 0.0
    %475 = vmatprep.subr.mxu0 0.0
    %476 = vmatpush1.xpose.msra.mxu0 0.0
    %477 = vmatprep.subr.mxu0 0.0
    %478 = vmatpush1.xpose.msra.mxu0 0.0
    %479 = vmatprep.subr.mxu0 0.0
    %480 = vmatpush1.xpose.msra.mxu0 0.0
    %481 = vmatprep.subr.mxu0 0.0
    %482 = vmatpush1.xpose.msra.mxu0 0.0
    %483 = vmatprep.subr.mxu0 0.0
    %484 = vmatpush1.xpose.msra.mxu0 0.0
    %485 = vmatprep.subr.mxu0 0.0
    %486 = vmatpush1.xpose.msra.mxu0 0.0
    %487 = vmatprep.subr.mxu0 0.0
    %488 = vmatpush1.xpose.msra.mxu0 0.0
    %489 = vmatprep.subr.mxu0 0.0
    %490 = vmatpush1.xpose.msra.mxu0 0.0
    %491 = vmatprep.subr.mxu0 0.0
    %492 = vmatpush1.xpose.msra.mxu0 0.0
    %493 = vmatprep.subr.mxu0 0.0
    %494 = vmatpush1.xpose.msra.mxu0 0.0
    %495 = vmatprep.subr.mxu0 0.0
    %496 = vmatpush1.xpose.msra.mxu0 0.0
    %497 = vmatprep.subr.mxu0 0.0
    %498 = vmatpush1.xpose.msra.mxu0 0.0
    %499 = vmatprep.subr.mxu0 0.0
    %500 = vmatpush1.xpose.msra.mxu0 0.0
    %501 = vmatprep.subr.mxu0 0.0
    %502 = vmatpush1.xpose.msra.mxu0 0.0
    %503 = vmatprep.subr.mxu0 0.0
    %504 = vmatpush1.xpose.msra.mxu0 0.0
    %505 = vmatprep.subr.mxu0 0.0
    %506 = vmatpush1.xpose.msra.mxu0 0.0
    %507 = vmatprep.subr.mxu0 0.0
    %508 = vmatpush1.xpose.msra.mxu0 0.0
    %509 = vmatprep.subr.mxu0 0.0
    %510 = vmatpush1.xpose.msra.mxu0 0.0
    %511 = vmatprep.subr.mxu0 0.0
    %512 = vmatpush1.xpose.msra.mxu0 0.0
    %513 = vmatprep.subr.mxu0 0.0
    %514 = vmatpush1.xpose.msra.mxu0 0.0
    %515 = vmatprep.subr.mxu0 0.0
    %516 = vmatpush1.xpose.msra.mxu0 0.0
    %517 = vmatprep.subr.mxu0 0.0
    %518 = vmatpush1.xpose.msra.mxu0 0.0
    %519 = vmatprep.mubr.f32.mxu0 0.0
    %520 = vmatmul.mubr.f32.gmra.mrb[0].mxu0 %v450
    %v521 = vpop.f32.mrb[0].mxu0
    %v522 = vadd.f32 0.0, %v521
    %v523 = vpop.f32.mrb[0].mxu0
    %524 = vdwg.mxu0
    %v525 = vsel %vm372, %v446, -inf
    %526 = vmax.xlane.f32.xlu0 %v525
    %v527 = vpop.xlane.xlu0 %526
    %v528 = vsel %vm372, %v522, -inf
    %529 = vmax.xlane.f32.xlu0 %v528
    %v530 = vpop.xlane.xlu0 %529
    %v531 = vsub.f32 %v446, %v527
    %v532 = vsub.f32 %v522, %v530
    %v533 = vmul.f32 %v531, 1.442695
    %v534 = vpow.pop %v533
    %v535 = vmul.f32 %v532, 1.442695
    %v536 = vpow.pop %v535
    %v537 = vsel %vm372, %v534, 0.0
    %538 = vadd.xlane.f32.xlu0 %v537
    %v539 = vpop.xlane.xlu0 %538
    %v540 = vsel %vm372, %v536, 0.0
    %541 = vadd.xlane.f32.xlu0 %v540
    %v542 = vpop.xlane.xlu0 %541
    %v543 = vrcp.pop %v539
    %v544 = vrcp.pop %v542
    %v545 = vmul.f32 %v539, %v543
    %v546 = vmul.f32 %v542, %v544
    %v547 = vsub.f32 2.0, %v545
    %v548 = vsub.f32 2.0, %v546
    %v549 = vmul.f32 %v543, %v547
    %v550 = vmul.f32 %v544, %v548
    %v552 = vsel %vm372, %v534, 0
    %554 = vmatprep.subr.mxu0 0.0
    %555 = vmatpush1.msra.mxu0 %v362
    %556 = vmatprep.subr.mxu0 0.0
    %557 = vmatpush1.msra.mxu0 0.0
    %558 = vmatprep.subr.mxu0 0.0
    %559 = vmatpush1.msra.mxu0 0.0
    %560 = vmatprep.subr.mxu0 0.0
    %561 = vmatpush1.msra.mxu0 0.0
    %562 = vmatprep.subr.mxu0 0.0
    %563 = vmatpush1.msra.mxu0 0.0
    %564 = vmatprep.subr.mxu0 0.0
    %565 = vmatpush1.msra.mxu0 0.0
    %566 = vmatprep.subr.mxu0 0.0
    %567 = vmatpush1.msra.mxu0 0.0
    %568 = vmatprep.subr.mxu0 0.0
    %569 = vmatpush1.msra.mxu0 0.0
    %570 = vmatprep.subr.mxu0 0.0
    %571 = vmatpush1.msra.mxu0 0.0
    %572 = vmatprep.subr.mxu0 0.0
    %573 = vmatpush1.msra.mxu0 0.0
    %574 = vmatprep.subr.mxu0 0.0
    %575 = vmatpush1.msra.mxu0 0.0
    %576 = vmatprep.subr.mxu0 0.0
    %577 = vmatpush1.msra.mxu0 0.0
    %578 = vmatprep.subr.mxu0 0.0
    %579 = vmatpush1.msra.mxu0 0.0
    %580 = vmatprep.subr.mxu0 0.0
    %581 = vmatpush1.msra.mxu0 0.0
    %582 = vmatprep.subr.mxu0 0.0
    %583 = vmatpush1.msra.mxu0 0.0
    %584 = vmatprep.subr.mxu0 0.0
    %585 = vmatpush1.msra.mxu0 0.0
    %586 = vmatprep.subr.mxu0 0.0
    %587 = vmatpush1.msra.mxu0 0.0
    %588 = vmatprep.subr.mxu0 0.0
    %589 = vmatpush1.msra.mxu0 0.0
    %590 = vmatprep.subr.mxu0 0.0
    %591 = vmatpush1.msra.mxu0 0.0
    %592 = vmatprep.subr.mxu0 0.0
    %593 = vmatpush1.msra.mxu0 0.0
    %594 = vmatprep.subr.mxu0 0.0
    %595 = vmatpush1.msra.mxu0 0.0
    %596 = vmatprep.subr.mxu0 0.0
    %597 = vmatpush1.msra.mxu0 0.0
    %598 = vmatprep.subr.mxu0 0.0
    %599 = vmatpush1.msra.mxu0 0.0
    %600 = vmatprep.subr.mxu0 0.0
    %601 = vmatpush1.msra.mxu0 0.0
    %602 = vmatprep.subr.mxu0 0.0
    %603 = vmatpush1.msra.mxu0 0.0
    %604 = vmatprep.subr.mxu0 0.0
    %605 = vmatpush1.msra.mxu0 0.0
    %606 = vmatprep.subr.mxu0 0.0
    %607 = vmatpush1.msra.mxu0 0.0
    %608 = vmatprep.subr.mxu0 0.0
    %609 = vmatpush1.msra.mxu0 0.0
    %610 = vmatprep.subr.mxu0 0.0
    %611 = vmatpush1.msra.mxu0 0.0
    %612 = vmatprep.subr.mxu0 0.0
    %613 = vmatpush1.msra.mxu0 0.0
    %614 = vmatprep.subr.mxu0 0.0
    %615 = vmatpush1.msra.mxu0 0.0
    %616 = vmatprep.subr.mxu0 0.0
    %617 = vmatpush1.msra.mxu0 0.0
    %618 = vmatprep.mubr.f32.mxu0 0.0
    %619 = vmatmul.mubr.f32.gmra.mrb[0].mxu0 %v552
    %v620 = vpop.f32.mrb[0].mxu0
    %v621 = vadd.f32 0.0, %v620
    %v622 = vpop.f32.mrb[0].mxu0
    %623 = vdwg.mxu0
    %v625 = vsel %vm372, %v536, 0
    %627 = vmatprep.subr.mxu0 0.0
    %628 = vmatpush1.msra.mxu0 %v367
    %629 = vmatprep.subr.mxu0 0.0
    %630 = vmatpush1.msra.mxu0 0.0
    %631 = vmatprep.subr.mxu0 0.0
    %632 = vmatpush1.msra.mxu0 0.0
    %633 = vmatprep.subr.mxu0 0.0
    %634 = vmatpush1.msra.mxu0 0.0
    %635 = vmatprep.subr.mxu0 0.0
    %636 = vmatpush1.msra.mxu0 0.0
    %637 = vmatprep.subr.mxu0 0.0
    %638 = vmatpush1.msra.mxu0 0.0
    %639 = vmatprep.subr.mxu0 0.0
    %640 = vmatpush1.msra.mxu0 0.0
    %641 = vmatprep.subr.mxu0 0.0
    %642 = vmatpush1.msra.mxu0 0.0
    %643 = vmatprep.subr.mxu0 0.0
    %644 = vmatpush1.msra.mxu0 0.0
    %645 = vmatprep.subr.mxu0 0.0
    %646 = vmatpush1.msra.mxu0 0.0
    %647 = vmatprep.subr.mxu0 0.0
    %648 = vmatpush1.msra.mxu0 0.0
    %649 = vmatprep.subr.mxu0 0.0
    %650 = vmatpush1.msra.mxu0 0.0
    %651 = vmatprep.subr.mxu0 0.0
    %652 = vmatpush1.msra.mxu0 0.0
    %653 = vmatprep.subr.mxu0 0.0
    %654 = vmatpush1.msra.mxu0 0.0
    %655 = vmatprep.subr.mxu0 0.0
    %656 = vmatpush1.msra.mxu0 0.0
    %657 = vmatprep.subr.mxu0 0.0
    %658 = vmatpush1.msra.mxu0 0.0
    %659 = vmatprep.subr.mxu0 0.0
    %660 = vmatpush1.msra.mxu0 0.0
    %661 = vmatprep.subr.mxu0 0.0
    %662 = vmatpush1.msra.mxu0 0.0
    %663 = vmatprep.subr.mxu0 0.0
    %664 = vmatpush1.msra.mxu0 0.0
    %665 = vmatprep.subr.mxu0 0.0
    %666 = vmatpush1.msra.mxu0 0.0
    %667 = vmatprep.subr.mxu0 0.0
    %668 = vmatpush1.msra.mxu0 0.0
    %669 = vmatprep.subr.mxu0 0.0
    %670 = vmatpush1.msra.mxu0 0.0
    %671 = vmatprep.subr.mxu0 0.0
    %672 = vmatpush1.msra.mxu0 0.0
    %673 = vmatprep.subr.mxu0 0.0
    %674 = vmatpush1.msra.mxu0 0.0
    %675 = vmatprep.subr.mxu0 0.0
    %676 = vmatpush1.msra.mxu0 0.0
    %677 = vmatprep.subr.mxu0 0.0
    %678 = vmatpush1.msra.mxu0 0.0
    %679 = vmatprep.subr.mxu0 0.0
    %680 = vmatpush1.msra.mxu0 0.0
    %681 = vmatprep.subr.mxu0 0.0
    %682 = vmatpush1.msra.mxu0 0.0
    %683 = vmatprep.subr.mxu0 0.0
    %684 = vmatpush1.msra.mxu0 0.0
    %685 = vmatprep.subr.mxu0 0.0
    %686 = vmatpush1.msra.mxu0 0.0
    %687 = vmatprep.subr.mxu0 0.0
    %688 = vmatpush1.msra.mxu0 0.0
    %689 = vmatprep.subr.mxu0 0.0
    %690 = vmatpush1.msra.mxu0 0.0
    %691 = vmatprep.mubr.f32.mxu0 0.0
    %692 = vmatmul.mubr.f32.gmra.mrb[0].mxu0 %v625
    %v693 = vpop.f32.mrb[0].mxu0
    %v694 = vadd.f32 0.0, %v693
    %v695 = vpop.f32.mrb[0].mxu0
    %696 = vdwg.mxu0
    %v697 = vmul.f32 %v621, %v549
    %v698 = vmul.f32 %v694, %v550
    %699 = vrot.lane.b32.xlu0 %v370, 120
    %v700 = vpop.permute.xlu0 %699
    %701 = vrot.lane.b32.xlu0 %v277, 120
    %v702 = vpop.permute.xlu0 %701
    %v703 = vsel %vm372, %v700, 0
    %v705 = vsel %vm372, %v702, 0
    %707 = vmatprep.subr.mxu0 0.0
    %708 = vmatpush1.xpose.msra.mxu0 %v705
    %709 = vmatprep.subr.mxu0 0.0
    %710 = vmatpush1.xpose.msra.mxu0 0.0
    %711 = vmatprep.subr.mxu0 0.0
    %712 = vmatpush1.xpose.msra.mxu0 0.0
    %713 = vmatprep.subr.mxu0 0.0
    %714 = vmatpush1.xpose.msra.mxu0 0.0
    %715 = vmatprep.subr.mxu0 0.0
    %716 = vmatpush1.xpose.msra.mxu0 0.0
    %717 = vmatprep.subr.mxu0 0.0
    %718 = vmatpush1.xpose.msra.mxu0 0.0
    %719 = vmatprep.subr.mxu0 0.0
    %720 = vmatpush1.xpose.msra.mxu0 0.0
    %721 = vmatprep.subr.mxu0 0.0
    %722 = vmatpush1.xpose.msra.mxu0 0.0
    %723 = vmatprep.subr.mxu0 0.0
    %724 = vmatpush1.xpose.msra.mxu0 0.0
    %725 = vmatprep.subr.mxu0 0.0
    %726 = vmatpush1.xpose.msra.mxu0 0.0
    %727 = vmatprep.subr.mxu0 0.0
    %728 = vmatpush1.xpose.msra.mxu0 0.0
    %729 = vmatprep.subr.mxu0 0.0
    %730 = vmatpush1.xpose.msra.mxu0 0.0
    %731 = vmatprep.subr.mxu0 0.0
    %732 = vmatpush1.xpose.msra.mxu0 0.0
    %733 = vmatprep.subr.mxu0 0.0
    %734 = vmatpush1.xpose.msra.mxu0 0.0
    %735 = vmatprep.subr.mxu0 0.0
    %736 = vmatpush1.xpose.msra.mxu0 0.0
    %737 = vmatprep.subr.mxu0 0.0
    %738 = vmatpush1.xpose.msra.mxu0 0.0
    %739 = vmatprep.subr.mxu0 0.0
    %740 = vmatpush1.xpose.msra.mxu0 0.0
    %741 = vmatprep.subr.mxu0 0.0
    %742 = vmatpush1.xpose.msra.mxu0 0.0
    %743 = vmatprep.subr.mxu0 0.0
    %744 = vmatpush1.xpose.msra.mxu0 0.0
    %745 = vmatprep.subr.mxu0 0.0
    %746 = vmatpush1.xpose.msra.mxu0 0.0
    %747 = vmatprep.subr.mxu0 0.0
    %748 = vmatpush1.xpose.msra.mxu0 0.0
    %749 = vmatprep.subr.mxu0 0.0
    %750 = vmatpush1.xpose.msra.mxu0 0.0
    %751 = vmatprep.subr.mxu0 0.0
    %752 = vmatpush1.xpose.msra.mxu0 0.0
    %753 = vmatprep.subr.mxu0 0.0
    %754 = vmatpush1.xpose.msra.mxu0 0.0
    %755 = vmatprep.subr.mxu0 0.0
    %756 = vmatpush1.xpose.msra.mxu0 0.0
    %757 = vmatprep.subr.mxu0 0.0
    %758 = vmatpush1.xpose.msra.mxu0 0.0
    %759 = vmatprep.subr.mxu0 0.0
    %760 = vmatpush1.xpose.msra.mxu0 0.0
    %761 = vmatprep.subr.mxu0 0.0
    %762 = vmatpush1.xpose.msra.mxu0 0.0
    %763 = vmatprep.subr.mxu0 0.0
    %764 = vmatpush1.xpose.msra.mxu0 0.0
    %765 = vmatprep.subr.mxu0 0.0
    %766 = vmatpush1.xpose.msra.mxu0 0.0
    %767 = vmatprep.subr.mxu0 0.0
    %768 = vmatpush1.xpose.msra.mxu0 0.0
    %769 = vmatprep.subr.mxu0 0.0
    %770 = vmatpush1.xpose.msra.mxu0 0.0
    %771 = vmatprep.mubr.f32.mxu0 0.0
    %772 = vmatmul.mubr.f32.gmra.mrb[0].mxu0 %v703
    %v773 = vpop.f32.mrb[0].mxu0
    %v774 = vadd.f32 0.0, %v773
    %v775 = vpop.f32.mrb[0].mxu0
    %776 = vdwg.mxu0
    %777 = vrot.lane.b32.xlu0 %v371, 120
    %v778 = vpop.permute.xlu0 %777
    %779 = vrot.lane.b32.xlu0 %v282, 120
    %v780 = vpop.permute.xlu0 %779
    %v781 = vsel %vm372, %v778, 0
    %v783 = vsel %vm372, %v780, 0
    %785 = vmatprep.subr.mxu0 0.0
    %786 = vmatpush1.xpose.msra.mxu0 %v783
    %787 = vmatprep.subr.mxu0 0.0
    %788 = vmatpush1.xpose.msra.mxu0 0.0
    %789 = vmatprep.subr.mxu0 0.0
    %790 = vmatpush1.xpose.msra.mxu0 0.0
    %791 = vmatprep.subr.mxu0 0.0
    %792 = vmatpush1.xpose.msra.mxu0 0.0
    %793 = vmatprep.subr.mxu0 0.0
    %794 = vmatpush1.xpose.msra.mxu0 0.0
    %795 = vmatprep.subr.mxu0 0.0
    %796 = vmatpush1.xpose.msra.mxu0 0.0
    %797 = vmatprep.subr.mxu0 0.0
    %798 = vmatpush1.xpose.msra.mxu0 0.0
    %799 = vmatprep.subr.mxu0 0.0
    %800 = vmatpush1.xpose.msra.mxu0 0.0
    %801 = vmatprep.subr.mxu0 0.0
    %802 = vmatpush1.xpose.msra.mxu0 0.0
    %803 = vmatprep.subr.mxu0 0.0
    %804 = vmatpush1.xpose.msra.mxu0 0.0
    %805 = vmatprep.subr.mxu0 0.0
    %806 = vmatpush1.xpose.msra.mxu0 0.0
    %807 = vmatprep.subr.mxu0 0.0
    %808 = vmatpush1.xpose.msra.mxu0 0.0
    %809 = vmatprep.subr.mxu0 0.0
    %810 = vmatpush1.xpose.msra.mxu0 0.0
    %811 = vmatprep.subr.mxu0 0.0
    %812 = vmatpush1.xpose.msra.mxu0 0.0
    %813 = vmatprep.subr.mxu0 0.0
    %814 = vmatpush1.xpose.msra.mxu0 0.0
    %815 = vmatprep.subr.mxu0 0.0
    %816 = vmatpush1.xpose.msra.mxu0 0.0
    %817 = vmatprep.subr.mxu0 0.0
    %818 = vmatpush1.xpose.msra.mxu0 0.0
    %819 = vmatprep.subr.mxu0 0.0
    %820 = vmatpush1.xpose.msra.mxu0 0.0
    %821 = vmatprep.subr.mxu0 0.0
    %822 = vmatpush1.xpose.msra.mxu0 0.0
    %823 = vmatprep.subr.mxu0 0.0
    %824 = vmatpush1.xpose.msra.mxu0 0.0
    %825 = vmatprep.subr.mxu0 0.0
    %826 = vmatpush1.xpose.msra.mxu0 0.0
    %827 = vmatprep.subr.mxu0 0.0
    %828 = vmatpush1.xpose.msra.mxu0 0.0
    %829 = vmatprep.subr.mxu0 0.0
    %830 = vmatpush1.xpose.msra.mxu0 0.0
    %831 = vmatprep.subr.mxu0 0.0
    %832 = vmatpush1.xpose.msra.mxu0 0.0
    %833 = vmatprep.subr.mxu0 0.0
    %834 = vmatpush1.xpose.msra.mxu0 0.0
    %835 = vmatprep.subr.mxu0 0.0
    %836 = vmatpush1.xpose.msra.mxu0 0.0
    %837 = vmatprep.subr.mxu0 0.0
    %838 = vmatpush1.xpose.msra.mxu0 0.0
    %839 = vmatprep.subr.mxu0 0.0
    %840 = vmatpush1.xpose.msra.mxu0 0.0
    %841 = vmatprep.subr.mxu0 0.0
    %842 = vmatpush1.xpose.msra.mxu0 0.0
    %843 = vmatprep.subr.mxu0 0.0
    %844 = vmatpush1.xpose.msra.mxu0 0.0
    %845 = vmatprep.subr.mxu0 0.0
    %846 = vmatpush1.xpose.msra.mxu0 0.0
    %847 = vmatprep.subr.mxu0 0.0
    %848 = vmatpush1.xpose.msra.mxu0 0.0
    %849 = vmatprep.mubr.f32.mxu0 0.0
    %850 = vmatmul.mubr.f32.gmra.mrb[0].mxu0 %v781
    %v851 = vpop.f32.mrb[0].mxu0
    %v852 = vadd.f32 0.0, %v851
    %v853 = vpop.f32.mrb[0].mxu0
    %854 = vdwg.mxu0
    %v855 = vsel %vm372, %v774, -inf
    %856 = vmax.xlane.f32.xlu0 %v855
    %v857 = vpop.xlane.xlu0 %856
    %v858 = vsel %vm372, %v852, -inf
    %859 = vmax.xlane.f32.xlu0 %v858
    %v860 = vpop.xlane.xlu0 %859
    %v861 = vsub.f32 %v774, %v857
    %v862 = vsub.f32 %v852, %v860
    %v863 = vmul.f32 %v861, 1.442695
    %v864 = vpow.pop %v863
    %v865 = vmul.f32 %v862, 1.442695
    %v866 = vpow.pop %v865
    %v867 = vsel %vm372, %v864, 0.0
    %868 = vadd.xlane.f32.xlu0 %v867
    %v869 = vpop.xlane.xlu0 %868
    %v870 = vsel %vm372, %v866, 0.0
    %871 = vadd.xlane.f32.xlu0 %v870
    %v872 = vpop.xlane.xlu0 %871
    %v873 = vrcp.pop %v869
    %v874 = vrcp.pop %v872
    %v875 = vmul.f32 %v869, %v873
    %v876 = vmul.f32 %v872, %v874
    %v877 = vsub.f32 2.0, %v875
    %v878 = vsub.f32 2.0, %v876
    %v879 = vmul.f32 %v873, %v877
    %v880 = vmul.f32 %v874, %v878
    %882 = vrot.lane.b32.xlu0 %v362, 120
    %v883 = vpop.permute.xlu0 %882
    %v886 = vsel %vm372, %v864, 0
    %888 = vmatprep.subr.mxu0 0.0
    %889 = vmatpush1.msra.mxu0 %v883
    %890 = vmatprep.subr.mxu0 0.0
    %891 = vmatpush1.msra.mxu0 0.0
    %892 = vmatprep.subr.mxu0 0.0
    %893 = vmatpush1.msra.mxu0 0.0
    %894 = vmatprep.subr.mxu0 0.0
    %895 = vmatpush1.msra.mxu0 0.0
    %896 = vmatprep.subr.mxu0 0.0
    %897 = vmatpush1.msra.mxu0 0.0
    %898 = vmatprep.subr.mxu0 0.0
    %899 = vmatpush1.msra.mxu0 0.0
    %900 = vmatprep.subr.mxu0 0.0
    %901 = vmatpush1.msra.mxu0 0.0
    %902 = vmatprep.subr.mxu0 0.0
    %903 = vmatpush1.msra.mxu0 0.0
    %904 = vmatprep.subr.mxu0 0.0
    %905 = vmatpush1.msra.mxu0 0.0
    %906 = vmatprep.subr.mxu0 0.0
    %907 = vmatpush1.msra.mxu0 0.0
    %908 = vmatprep.subr.mxu0 0.0
    %909 = vmatpush1.msra.mxu0 0.0
    %910 = vmatprep.subr.mxu0 0.0
    %911 = vmatpush1.msra.mxu0 0.0
    %912 = vmatprep.subr.mxu0 0.0
    %913 = vmatpush1.msra.mxu0 0.0
    %914 = vmatprep.subr.mxu0 0.0
    %915 = vmatpush1.msra.mxu0 0.0
    %916 = vmatprep.subr.mxu0 0.0
    %917 = vmatpush1.msra.mxu0 0.0
    %918 = vmatprep.subr.mxu0 0.0
    %919 = vmatpush1.msra.mxu0 0.0
    %920 = vmatprep.subr.mxu0 0.0
    %921 = vmatpush1.msra.mxu0 0.0
    %922 = vmatprep.subr.mxu0 0.0
    %923 = vmatpush1.msra.mxu0 0.0
    %924 = vmatprep.subr.mxu0 0.0
    %925 = vmatpush1.msra.mxu0 0.0
    %926 = vmatprep.subr.mxu0 0.0
    %927 = vmatpush1.msra.mxu0 0.0
    %928 = vmatprep.subr.mxu0 0.0
    %929 = vmatpush1.msra.mxu0 0.0
    %930 = vmatprep.subr.mxu0 0.0
    %931 = vmatpush1.msra.mxu0 0.0
    %932 = vmatprep.subr.mxu0 0.0
    %933 = vmatpush1.msra.mxu0 0.0
    %934 = vmatprep.subr.mxu0 0.0
    %935 = vmatpush1.msra.mxu0 0.0
    %936 = vmatprep.subr.mxu0 0.0
    %937 = vmatpush1.msra.mxu0 0.0
    %938 = vmatprep.subr.mxu0 0.0
    %939 = vmatpush1.msra.mxu0 0.0
    %940 = vmatprep.subr.mxu0 0.0
    %941 = vmatpush1.msra.mxu0 0.0
    %942 = vmatprep.subr.mxu0 0.0
    %943 = vmatpush1.msra.mxu0 0.0
    %944 = vmatprep.subr.mxu0 0.0
    %945 = vmatpush1.msra.mxu0 0.0
    %946 = vmatprep.subr.mxu0 0.0
    %947 = vmatpush1.msra.mxu0 0.0
    %948 = vmatprep.subr.mxu0 0.0
    %949 = vmatpush1.msra.mxu0 0.0
    %950 = vmatprep.subr.mxu0 0.0
    %951 = vmatpush1.msra.mxu0 0.0
    %952 = vmatprep.mubr.f32.mxu0 0.0
    %953 = vmatmul.mubr.f32.gmra.mrb[0].mxu0 %v886
    %v954 = vpop.f32.mrb[0].mxu0
    %v955 = vadd.f32 0.0, %v954
    %v956 = vpop.f32.mrb[0].mxu0
    %957 = vdwg.mxu0
    %959 = vrot.lane.b32.xlu0 %v367, 120
    %v960 = vpop.permute.xlu0 %959
    %v963 = vsel %vm372, %v866, 0
    %965 = vmatprep.subr.mxu0 0.0
    %966 = vmatpush1.msra.mxu0 %v960
    %967 = vmatprep.subr.mxu0 0.0
    %968 = vmatpush1.msra.mxu0 0.0
    %969 = vmatprep.subr.mxu0 0.0
    %970 = vmatpush1.msra.mxu0 0.0
    %971 = vmatprep.subr.mxu0 0.0
    %972 = vmatpush1.msra.mxu0 0.0
    %973 = vmatprep.subr.mxu0 0.0
    %974 = vmatpush1.msra.mxu0 0.0
    %975 = vmatprep.subr.mxu0 0.0
    %976 = vmatpush1.msra.mxu0 0.0
    %977 = vmatprep.subr.mxu0 0.0
    %978 = vmatpush1.msra.mxu0 0.0
    %979 = vmatprep.subr.mxu0 0.0
    %980 = vmatpush1.msra.mxu0 0.0
    %981 = vmatprep.subr.mxu0 0.0
    %982 = vmatpush1.msra.mxu0 0.0
    %983 = vmatprep.subr.mxu0 0.0
    %984 = vmatpush1.msra.mxu0 0.0
    %985 = vmatprep.subr.mxu0 0.0
    %986 = vmatpush1.msra.mxu0 0.0
    %987 = vmatprep.subr.mxu0 0.0
    %988 = vmatpush1.msra.mxu0 0.0
    %989 = vmatprep.subr.mxu0 0.0
    %990 = vmatpush1.msra.mxu0 0.0
    %991 = vmatprep.subr.mxu0 0.0
    %992 = vmatpush1.msra.mxu0 0.0
    %993 = vmatprep.subr.mxu0 0.0
    %994 = vmatpush1.msra.mxu0 0.0
    %995 = vmatprep.subr.mxu0 0.0
    %996 = vmatpush1.msra.mxu0 0.0
    %997 = vmatprep.subr.mxu0 0.0
    %998 = vmatpush1.msra.mxu0 0.0
    %999 = vmatprep.subr.mxu0 0.0
    %1000 = vmatpush1.msra.mxu0 0.0
    %1001 = vmatprep.subr.mxu0 0.0
    %1002 = vmatpush1.msra.mxu0 0.0
    %1003 = vmatprep.subr.mxu0 0.0
    %1004 = vmatpush1.msra.mxu0 0.0
    %1005 = vmatprep.subr.mxu0 0.0
    %1006 = vmatpush1.msra.mxu0 0.0
    %1007 = vmatprep.subr.mxu0 0.0
    %1008 = vmatpush1.msra.mxu0 0.0
    %1009 = vmatprep.subr.mxu0 0.0
    %1010 = vmatpush1.msra.mxu0 0.0
    %1011 = vmatprep.subr.mxu0 0.0
    %1012 = vmatpush1.msra.mxu0 0.0
    %1013 = vmatprep.subr.mxu0 0.0
    %1014 = vmatpush1.msra.mxu0 0.0
    %1015 = vmatprep.subr.mxu0 0.0
    %1016 = vmatpush1.msra.mxu0 0.0
    %1017 = vmatprep.subr.mxu0 0.0
    %1018 = vmatpush1.msra.mxu0 0.0
    %1019 = vmatprep.subr.mxu0 0.0
    %1020 = vmatpush1.msra.mxu0 0.0
    %1021 = vmatprep.subr.mxu0 0.0
    %1022 = vmatpush1.msra.mxu0 0.0
    %1023 = vmatprep.subr.mxu0 0.0
    %1024 = vmatpush1.msra.mxu0 0.0
    %1025 = vmatprep.subr.mxu0 0.0
    %1026 = vmatpush1.msra.mxu0 0.0
    %1027 = vmatprep.subr.mxu0 0.0
    %1028 = vmatpush1.msra.mxu0 0.0
    %1029 = vmatprep.mubr.f32.mxu0 0.0
    %1030 = vmatmul.mubr.f32.gmra.mrb[0].mxu0 %v963
    %v1031 = vpop.f32.mrb[0].mxu0
    %v1032 = vadd.f32 0.0, %v1031
    %v1033 = vpop.f32.mrb[0].mxu0
    %1034 = vdwg.mxu0
    %v1035 = vmul.f32 %v955, %v879
    %v1036 = vmul.f32 %v1032, %v880
    %1037 = vrot.lane.b32.xlu0 %v370, 112
    %v1038 = vpop.permute.xlu0 %1037
    %1039 = vrot.lane.b32.xlu0 %v277, 112
    %v1040 = vpop.permute.xlu0 %1039
    %v1041 = vsel %vm372, %v1038, 0
    %v1043 = vsel %vm372, %v1040, 0
    %1045 = vmatprep.subr.mxu0 0.0
    %1046 = vmatpush1.xpose.msra.mxu0 %v1043
    %1047 = vmatprep.subr.mxu0 0.0
    %1048 = vmatpush1.xpose.msra.mxu0 0.0
    %1049 = vmatprep.subr.mxu0 0.0
    %1050 = vmatpush1.xpose.msra.mxu0 0.0
    %1051 = vmatprep.subr.mxu0 0.0
    %1052 = vmatpush1.xpose.msra.mxu0 0.0
    %1053 = vmatprep.subr.mxu0 0.0
    %1054 = vmatpush1.xpose.msra.mxu0 0.0
    %1055 = vmatprep.subr.mxu0 0.0
    %1056 = vmatpush1.xpose.msra.mxu0 0.0
    %1057 = vmatprep.subr.mxu0 0.0
    %1058 = vmatpush1.xpose.msra.mxu0 0.0
    %1059 = vmatprep.subr.mxu0 0.0
    %1060 = vmatpush1.xpose.msra.mxu0 0.0
    %1061 = vmatprep.subr.mxu0 0.0
    %1062 = vmatpush1.xpose.msra.mxu0 0.0
    %1063 = vmatprep.subr.mxu0 0.0
    %1064 = vmatpush1.xpose.msra.mxu0 0.0
    %1065 = vmatprep.subr.mxu0 0.0
    %1066 = vmatpush1.xpose.msra.mxu0 0.0
    %1067 = vmatprep.subr.mxu0 0.0
    %1068 = vmatpush1.xpose.msra.mxu0 0.0
    %1069 = vmatprep.subr.mxu0 0.0
    %1070 = vmatpush1.xpose.msra.mxu0 0.0
    %1071 = vmatprep.subr.mxu0 0.0
    %1072 = vmatpush1.xpose.msra.mxu0 0.0
    %1073 = vmatprep.subr.mxu0 0.0
    %1074 = vmatpush1.xpose.msra.mxu0 0.0
    %1075 = vmatprep.subr.mxu0 0.0
    %1076 = vmatpush1.xpose.msra.mxu0 0.0
    %1077 = vmatprep.subr.mxu0 0.0
    %1078 = vmatpush1.xpose.msra.mxu0 0.0
    %1079 = vmatprep.subr.mxu0 0.0
    %1080 = vmatpush1.xpose.msra.mxu0 0.0
    %1081 = vmatprep.subr.mxu0 0.0
    %1082 = vmatpush1.xpose.msra.mxu0 0.0
    %1083 = vmatprep.subr.mxu0 0.0
    %1084 = vmatpush1.xpose.msra.mxu0 0.0
    %1085 = vmatprep.subr.mxu0 0.0
    %1086 = vmatpush1.xpose.msra.mxu0 0.0
    %1087 = vmatprep.subr.mxu0 0.0
    %1088 = vmatpush1.xpose.msra.mxu0 0.0
    %1089 = vmatprep.subr.mxu0 0.0
    %1090 = vmatpush1.xpose.msra.mxu0 0.0
    %1091 = vmatprep.subr.mxu0 0.0
    %1092 = vmatpush1.xpose.msra.mxu0 0.0
    %1093 = vmatprep.subr.mxu0 0.0
    %1094 = vmatpush1.xpose.msra.mxu0 0.0
    %1095 = vmatprep.subr.mxu0 0.0
    %1096 = vmatpush1.xpose.msra.mxu0 0.0
    %1097 = vmatprep.subr.mxu0 0.0
    %1098 = vmatpush1.xpose.msra.mxu0 0.0
    %1099 = vmatprep.subr.mxu0 0.0
    %1100 = vmatpush1.xpose.msra.mxu0 0.0
    %1101 = vmatprep.subr.mxu0 0.0
    %1102 = vmatpush1.xpose.msra.mxu0 0.0
    %1103 = vmatprep.subr.mxu0 0.0
    %1104 = vmatpush1.xpose.msra.mxu0 0.0
    %1105 = vmatprep.subr.mxu0 0.0
    %1106 = vmatpush1.xpose.msra.mxu0 0.0
    %1107 = vmatprep.subr.mxu0 0.0
    %1108 = vmatpush1.xpose.msra.mxu0 0.0
    %1109 = vmatprep.mubr.f32.mxu0 0.0
    %1110 = vmatmul.mubr.f32.gmra.mrb[0].mxu0 %v1041
    %v1111 = vpop.f32.mrb[0].mxu0
    %v1112 = vadd.f32 0.0, %v1111
    %v1113 = vpop.f32.mrb[0].mxu0
    %1114 = vdwg.mxu0
    %1115 = vrot.lane.b32.xlu0 %v371, 112
    %v1116 = vpop.permute.xlu0 %1115
    %1117 = vrot.lane.b32.xlu0 %v282, 112
    %v1118 = vpop.permute.xlu0 %1117
    %v1119 = vsel %vm372, %v1116, 0
    %v1121 = vsel %vm372, %v1118, 0
    %1123 = vmatprep.subr.mxu0 0.0
    %1124 = vmatpush1.xpose.msra.mxu0 %v1121
    %1125 = vmatprep.subr.mxu0 0.0
    %1126 = vmatpush1.xpose.msra.mxu0 0.0
    %1127 = vmatprep.subr.mxu0 0.0
    %1128 = vmatpush1.xpose.msra.mxu0 0.0
    %1129 = vmatprep.subr.mxu0 0.0
    %1130 = vmatpush1.xpose.msra.mxu0 0.0
    %1131 = vmatprep.subr.mxu0 0.0
    %1132 = vmatpush1.xpose.msra.mxu0 0.0
    %1133 = vmatprep.subr.mxu0 0.0
    %1134 = vmatpush1.xpose.msra.mxu0 0.0
    %1135 = vmatprep.subr.mxu0 0.0
    %1136 = vmatpush1.xpose.msra.mxu0 0.0
    %1137 = vmatprep.subr.mxu0 0.0
    %1138 = vmatpush1.xpose.msra.mxu0 0.0
    %1139 = vmatprep.subr.mxu0 0.0
    %1140 = vmatpush1.xpose.msra.mxu0 0.0
    %1141 = vmatprep.subr.mxu0 0.0
    %1142 = vmatpush1.xpose.msra.mxu0 0.0
    %1143 = vmatprep.subr.mxu0 0.0
    %1144 = vmatpush1.xpose.msra.mxu0 0.0
    %1145 = vmatprep.subr.mxu0 0.0
    %1146 = vmatpush1.xpose.msra.mxu0 0.0
    %1147 = vmatprep.subr.mxu0 0.0
    %1148 = vmatpush1.xpose.msra.mxu0 0.0
    %1149 = vmatprep.subr.mxu0 0.0
    %1150 = vmatpush1.xpose.msra.mxu0 0.0
    %1151 = vmatprep.subr.mxu0 0.0
    %1152 = vmatpush1.xpose.msra.mxu0 0.0
    %1153 = vmatprep.subr.mxu0 0.0
    %1154 = vmatpush1.xpose.msra.mxu0 0.0
    %1155 = vmatprep.subr.mxu0 0.0
    %1156 = vmatpush1.xpose.msra.mxu0 0.0
    %1157 = vmatprep.subr.mxu0 0.0
    %1158 = vmatpush1.xpose.msra.mxu0 0.0
    %1159 = vmatprep.subr.mxu0 0.0
    %1160 = vmatpush1.xpose.msra.mxu0 0.0
    %1161 = vmatprep.subr.mxu0 0.0
    %1162 = vmatpush1.xpose.msra.mxu0 0.0
    %1163 = vmatprep.subr.mxu0 0.0
    %1164 = vmatpush1.xpose.msra.mxu0 0.0
    %1165 = vmatprep.subr.mxu0 0.0
    %1166 = vmatpush1.xpose.msra.mxu0 0.0
    %1167 = vmatprep.subr.mxu0 0.0
    %1168 = vmatpush1.xpose.msra.mxu0 0.0
    %1169 = vmatprep.subr.mxu0 0.0
    %1170 = vmatpush1.xpose.msra.mxu0 0.0
    %1171 = vmatprep.subr.mxu0 0.0
    %1172 = vmatpush1.xpose.msra.mxu0 0.0
    %1173 = vmatprep.subr.mxu0 0.0
    %1174 = vmatpush1.xpose.msra.mxu0 0.0
    %1175 = vmatprep.subr.mxu0 0.0
    %1176 = vmatpush1.xpose.msra.mxu0 0.0
    %1177 = vmatprep.subr.mxu0 0.0
    %1178 = vmatpush1.xpose.msra.mxu0 0.0
    %1179 = vmatprep.subr.mxu0 0.0
    %1180 = vmatpush1.xpose.msra.mxu0 0.0
    %1181 = vmatprep.subr.mxu0 0.0
    %1182 = vmatpush1.xpose.msra.mxu0 0.0
    %1183 = vmatprep.subr.mxu0 0.0
    %1184 = vmatpush1.xpose.msra.mxu0 0.0
    %1185 = vmatprep.subr.mxu0 0.0
    %1186 = vmatpush1.xpose.msra.mxu0 0.0
    %1187 = vmatprep.mubr.f32.mxu0 0.0
    %1188 = vmatmul.mubr.f32.gmra.mrb[0].mxu0 %v1119
    %v1189 = vpop.f32.mrb[0].mxu0
    %v1190 = vadd.f32 0.0, %v1189
    %v1191 = vpop.f32.mrb[0].mxu0
    %1192 = vdwg.mxu0
    %v1193 = vsel %vm372, %v1112, -inf
    %1194 = vmax.xlane.f32.xlu0 %v1193
    %v1195 = vpop.xlane.xlu0 %1194
    %v1196 = vsel %vm372, %v1190, -inf
    %1197 = vmax.xlane.f32.xlu0 %v1196
    %v1198 = vpop.xlane.xlu0 %1197
    %v1199 = vsub.f32 %v1112, %v1195
    %v1200 = vsub.f32 %v1190, %v1198
    %v1201 = vmul.f32 %v1199, 1.442695
    %v1202 = vpow.pop %v1201
    %v1203 = vmul.f32 %v1200, 1.442695
    %v1204 = vpow.pop %v1203
    %v1205 = vsel %vm372, %v1202, 0.0
    %1206 = vadd.xlane.f32.xlu0 %v1205
    %v1207 = vpop.xlane.xlu0 %1206
    %v1208 = vsel %vm372, %v1204, 0.0
    %1209 = vadd.xlane.f32.xlu0 %v1208
    %v1210 = vpop.xlane.xlu0 %1209
    %v1211 = vrcp.pop %v1207
    %v1212 = vrcp.pop %v1210
    %v1213 = vmul.f32 %v1207, %v1211
    %v1214 = vmul.f32 %v1210, %v1212
    %v1215 = vsub.f32 2.0, %v1213
    %v1216 = vsub.f32 2.0, %v1214
    %v1217 = vmul.f32 %v1211, %v1215
    %v1218 = vmul.f32 %v1212, %v1216
    %1219 = vrot.lane.b32.xlu0 %v362, 112
    %v1220 = vpop.permute.xlu0 %1219
    %v1223 = vsel %vm372, %v1202, 0
    %1225 = vmatprep.subr.mxu0 0.0
    %1226 = vmatpush1.msra.mxu0 %v1220
    %1227 = vmatprep.subr.mxu0 0.0
    %1228 = vmatpush1.msra.mxu0 0.0
    %1229 = vmatprep.subr.mxu0 0.0
    %1230 = vmatpush1.msra.mxu0 0.0
    %1231 = vmatprep.subr.mxu0 0.0
    %1232 = vmatpush1.msra.mxu0 0.0
    %1233 = vmatprep.subr.mxu0 0.0
    %1234 = vmatpush1.msra.mxu0 0.0
    %1235 = vmatprep.subr.mxu0 0.0
    %1236 = vmatpush1.msra.mxu0 0.0
    %1237 = vmatprep.subr.mxu0 0.0
    %1238 = vmatpush1.msra.mxu0 0.0
    %1239 = vmatprep.subr.mxu0 0.0
    %1240 = vmatpush1.msra.mxu0 0.0
    %1241 = vmatprep.subr.mxu0 0.0
    %1242 = vmatpush1.msra.mxu0 0.0
    %1243 = vmatprep.subr.mxu0 0.0
    %1244 = vmatpush1.msra.mxu0 0.0
    %1245 = vmatprep.subr.mxu0 0.0
    %1246 = vmatpush1.msra.mxu0 0.0
    %1247 = vmatprep.subr.mxu0 0.0
    %1248 = vmatpush1.msra.mxu0 0.0
    %1249 = vmatprep.subr.mxu0 0.0
    %1250 = vmatpush1.msra.mxu0 0.0
    %1251 = vmatprep.subr.mxu0 0.0
    %1252 = vmatpush1.msra.mxu0 0.0
    %1253 = vmatprep.subr.mxu0 0.0
    %1254 = vmatpush1.msra.mxu0 0.0
    %1255 = vmatprep.subr.mxu0 0.0
    %1256 = vmatpush1.msra.mxu0 0.0
    %1257 = vmatprep.subr.mxu0 0.0
    %1258 = vmatpush1.msra.mxu0 0.0
    %1259 = vmatprep.subr.mxu0 0.0
    %1260 = vmatpush1.msra.mxu0 0.0
    %1261 = vmatprep.subr.mxu0 0.0
    %1262 = vmatpush1.msra.mxu0 0.0
    %1263 = vmatprep.subr.mxu0 0.0
    %1264 = vmatpush1.msra.mxu0 0.0
    %1265 = vmatprep.subr.mxu0 0.0
    %1266 = vmatpush1.msra.mxu0 0.0
    %1267 = vmatprep.subr.mxu0 0.0
    %1268 = vmatpush1.msra.mxu0 0.0
    %1269 = vmatprep.subr.mxu0 0.0
    %1270 = vmatpush1.msra.mxu0 0.0
    %1271 = vmatprep.subr.mxu0 0.0
    %1272 = vmatpush1.msra.mxu0 0.0
    %1273 = vmatprep.subr.mxu0 0.0
    %1274 = vmatpush1.msra.mxu0 0.0
    %1275 = vmatprep.subr.mxu0 0.0
    %1276 = vmatpush1.msra.mxu0 0.0
    %1277 = vmatprep.subr.mxu0 0.0
    %1278 = vmatpush1.msra.mxu0 0.0
    %1279 = vmatprep.subr.mxu0 0.0
    %1280 = vmatpush1.msra.mxu0 0.0
    %1281 = vmatprep.subr.mxu0 0.0
    %1282 = vmatpush1.msra.mxu0 0.0
    %1283 = vmatprep.subr.mxu0 0.0
    %1284 = vmatpush1.msra.mxu0 0.0
    %1285 = vmatprep.subr.mxu0 0.0
    %1286 = vmatpush1.msra.mxu0 0.0
    %1287 = vmatprep.subr.mxu0 0.0
    %1288 = vmatpush1.msra.mxu0 0.0
    %1289 = vmatprep.mubr.f32.mxu0 0.0
    %1290 = vmatmul.mubr.f32.gmra.mrb[0].mxu0 %v1223
    %v1291 = vpop.f32.mrb[0].mxu0
    %v1292 = vadd.f32 0.0, %v1291
    %v1293 = vpop.f32.mrb[0].mxu0
    %1294 = vdwg.mxu0
    %1295 = vrot.lane.b32.xlu0 %v367, 112
    %v1296 = vpop.permute.xlu0 %1295
    %v1299 = vsel %vm372, %v1204, 0
    %1301 = vmatprep.subr.mxu0 0.0
    %1302 = vmatpush1.msra.mxu0 %v1296
    %1303 = vmatprep.subr.mxu0 0.0
    %1304 = vmatpush1.msra.mxu0 0.0
    %1305 = vmatprep.subr.mxu0 0.0
    %1306 = vmatpush1.msra.mxu0 0.0
    %1307 = vmatprep.subr.mxu0 0.0
    %1308 = vmatpush1.msra.mxu0 0.0
    %1309 = vmatprep.subr.mxu0 0.0
    %1310 = vmatpush1.msra.mxu0 0.0
    %1311 = vmatprep.subr.mxu0 0.0
    %1312 = vmatpush1.msra.mxu0 0.0
    %1313 = vmatprep.subr.mxu0 0.0
    %1314 = vmatpush1.msra.mxu0 0.0
    %1315 = vmatprep.subr.mxu0 0.0
    %1316 = vmatpush1.msra.mxu0 0.0
    %1317 = vmatprep.subr.mxu0 0.0
    %1318 = vmatpush1.msra.mxu0 0.0
    %1319 = vmatprep.subr.mxu0 0.0
    %1320 = vmatpush1.msra.mxu0 0.0
    %1321 = vmatprep.subr.mxu0 0.0
    %1322 = vmatpush1.msra.mxu0 0.0
    %1323 = vmatprep.subr.mxu0 0.0
    %1324 = vmatpush1.msra.mxu0 0.0
    %1325 = vmatprep.subr.mxu0 0.0
    %1326 = vmatpush1.msra.mxu0 0.0
    %1327 = vmatprep.subr.mxu0 0.0
    %1328 = vmatpush1.msra.mxu0 0.0
    %1329 = vmatprep.subr.mxu0 0.0
    %1330 = vmatpush1.msra.mxu0 0.0
    %1331 = vmatprep.subr.mxu0 0.0
    %1332 = vmatpush1.msra.mxu0 0.0
    %1333 = vmatprep.subr.mxu0 0.0
    %1334 = vmatpush1.msra.mxu0 0.0
    %1335 = vmatprep.subr.mxu0 0.0
    %1336 = vmatpush1.msra.mxu0 0.0
    %1337 = vmatprep.subr.mxu0 0.0
    %1338 = vmatpush1.msra.mxu0 0.0
    %1339 = vmatprep.subr.mxu0 0.0
    %1340 = vmatpush1.msra.mxu0 0.0
    %1341 = vmatprep.subr.mxu0 0.0
    %1342 = vmatpush1.msra.mxu0 0.0
    %1343 = vmatprep.subr.mxu0 0.0
    %1344 = vmatpush1.msra.mxu0 0.0
    %1345 = vmatprep.subr.mxu0 0.0
    %1346 = vmatpush1.msra.mxu0 0.0
    %1347 = vmatprep.subr.mxu0 0.0
    %1348 = vmatpush1.msra.mxu0 0.0
    %1349 = vmatprep.subr.mxu0 0.0
    %1350 = vmatpush1.msra.mxu0 0.0
    %1351 = vmatprep.subr.mxu0 0.0
    %1352 = vmatpush1.msra.mxu0 0.0
    %1353 = vmatprep.subr.mxu0 0.0
    %1354 = vmatpush1.msra.mxu0 0.0
    %1355 = vmatprep.subr.mxu0 0.0
    %1356 = vmatpush1.msra.mxu0 0.0
    %1357 = vmatprep.subr.mxu0 0.0
    %1358 = vmatpush1.msra.mxu0 0.0
    %1359 = vmatprep.subr.mxu0 0.0
    %1360 = vmatpush1.msra.mxu0 0.0
    %1361 = vmatprep.subr.mxu0 0.0
    %1362 = vmatpush1.msra.mxu0 0.0
    %1363 = vmatprep.subr.mxu0 0.0
    %1364 = vmatpush1.msra.mxu0 0.0
    %1365 = vmatprep.mubr.f32.mxu0 0.0
    %1366 = vmatmul.mubr.f32.gmra.mrb[0].mxu0 %v1299
    %v1367 = vpop.f32.mrb[0].mxu0
    %v1368 = vadd.f32 0.0, %v1367
    %v1369 = vpop.f32.mrb[0].mxu0
    %1370 = vdwg.mxu0
    %v1371 = vmul.f32 %v1292, %v1217
    %v1372 = vmul.f32 %v1368, %v1218
    %1373 = vrot.lane.b32.xlu0 %v370, 104
    %v1374 = vpop.permute.xlu0 %1373
    %1375 = vrot.lane.b32.xlu0 %v277, 104
    %v1376 = vpop.permute.xlu0 %1375
    %v1377 = vsel %vm372, %v1374, 0
    %v1379 = vsel %vm372, %v1376, 0
    %1381 = vmatprep.subr.mxu0 0.0
    %1382 = vmatpush1.xpose.msra.mxu0 %v1379
    %1383 = vmatprep.subr.mxu0 0.0
    %1384 = vmatpush1.xpose.msra.mxu0 0.0
    %1385 = vmatprep.subr.mxu0 0.0
    %1386 = vmatpush1.xpose.msra.mxu0 0.0
    %1387 = vmatprep.subr.mxu0 0.0
    %1388 = vmatpush1.xpose.msra.mxu0 0.0
    %1389 = vmatprep.subr.mxu0 0.0
    %1390 = vmatpush1.xpose.msra.mxu0 0.0
    %1391 = vmatprep.subr.mxu0 0.0
    %1392 = vmatpush1.xpose.msra.mxu0 0.0
    %1393 = vmatprep.subr.mxu0 0.0
    %1394 = vmatpush1.xpose.msra.mxu0 0.0
    %1395 = vmatprep.subr.mxu0 0.0
    %1396 = vmatpush1.xpose.msra.mxu0 0.0
    %1397 = vmatprep.subr.mxu0 0.0
    %1398 = vmatpush1.xpose.msra.mxu0 0.0
    %1399 = vmatprep.subr.mxu0 0.0
    %1400 = vmatpush1.xpose.msra.mxu0 0.0
    %1401 = vmatprep.subr.mxu0 0.0
    %1402 = vmatpush1.xpose.msra.mxu0 0.0
    %1403 = vmatprep.subr.mxu0 0.0
    %1404 = vmatpush1.xpose.msra.mxu0 0.0
    %1405 = vmatprep.subr.mxu0 0.0
    %1406 = vmatpush1.xpose.msra.mxu0 0.0
    %1407 = vmatprep.subr.mxu0 0.0
    %1408 = vmatpush1.xpose.msra.mxu0 0.0
    %1409 = vmatprep.subr.mxu0 0.0
    %1410 = vmatpush1.xpose.msra.mxu0 0.0
    %1411 = vmatprep.subr.mxu0 0.0
    %1412 = vmatpush1.xpose.msra.mxu0 0.0
    %1413 = vmatprep.subr.mxu0 0.0
    %1414 = vmatpush1.xpose.msra.mxu0 0.0
    %1415 = vmatprep.subr.mxu0 0.0
    %1416 = vmatpush1.xpose.msra.mxu0 0.0
    %1417 = vmatprep.subr.mxu0 0.0
    %1418 = vmatpush1.xpose.msra.mxu0 0.0
    %1419 = vmatprep.subr.mxu0 0.0
    %1420 = vmatpush1.xpose.msra.mxu0 0.0
    %1421 = vmatprep.subr.mxu0 0.0
    %1422 = vmatpush1.xpose.msra.mxu0 0.0
    %1423 = vmatprep.subr.mxu0 0.0
    %1424 = vmatpush1.xpose.msra.mxu0 0.0
    %1425 = vmatprep.subr.mxu0 0.0
    %1426 = vmatpush1.xpose.msra.mxu0 0.0
    %1427 = vmatprep.subr.mxu0 0.0
    %1428 = vmatpush1.xpose.msra.mxu0 0.0
    %1429 = vmatprep.subr.mxu0 0.0
    %1430 = vmatpush1.xpose.msra.mxu0 0.0
    %1431 = vmatprep.subr.mxu0 0.0
    %1432 = vmatpush1.xpose.msra.mxu0 0.0
    %1433 = vmatprep.subr.mxu0 0.0
    %1434 = vmatpush1.xpose.msra.mxu0 0.0
    %1435 = vmatprep.subr.mxu0 0.0
    %1436 = vmatpush1.xpose.msra.mxu0 0.0
    %1437 = vmatprep.subr.mxu0 0.0
    %1438 = vmatpush1.xpose.msra.mxu0 0.0
    %1439 = vmatprep.subr.mxu0 0.0
    %1440 = vmatpush1.xpose.msra.mxu0 0.0
    %1441 = vmatprep.subr.mxu0 0.0
    %1442 = vmatpush1.xpose.msra.mxu0 0.0
    %1443 = vmatprep.subr.mxu0 0.0
    %1444 = vmatpush1.xpose.msra.mxu0 0.0
    %1445 = vmatprep.mubr.f32.mxu0 0.0
    %1446 = vmatmul.mubr.f32.gmra.mrb[0].mxu0 %v1377
    %v1447 = vpop.f32.mrb[0].mxu0
    %v1448 = vadd.f32 0.0, %v1447
    %v1449 = vpop.f32.mrb[0].mxu0
    %1450 = vdwg.mxu0
    %1451 = vrot.lane.b32.xlu0 %v371, 104
    %v1452 = vpop.permute.xlu0 %1451
    %1453 = vrot.lane.b32.xlu0 %v282, 104
    %v1454 = vpop.permute.xlu0 %1453
    %v1455 = vsel %vm372, %v1452, 0
    %v1457 = vsel %vm372, %v1454, 0
    %1459 = vmatprep.subr.mxu0 0.0
    %1460 = vmatpush1.xpose.msra.mxu0 %v1457
    %1461 = vmatprep.subr.mxu0 0.0
    %1462 = vmatpush1.xpose.msra.mxu0 0.0
    %1463 = vmatprep.subr.mxu0 0.0
    %1464 = vmatpush1.xpose.msra.mxu0 0.0
    %1465 = vmatprep.subr.mxu0 0.0
    %1466 = vmatpush1.xpose.msra.mxu0 0.0
    %1467 = vmatprep.subr.mxu0 0.0
    %1468 = vmatpush1.xpose.msra.mxu0 0.0
    %1469 = vmatprep.subr.mxu0 0.0
    %1470 = vmatpush1.xpose.msra.mxu0 0.0
    %1471 = vmatprep.subr.mxu0 0.0
    %1472 = vmatpush1.xpose.msra.mxu0 0.0
    %1473 = vmatprep.subr.mxu0 0.0
    %1474 = vmatpush1.xpose.msra.mxu0 0.0
    %1475 = vmatprep.subr.mxu0 0.0
    %1476 = vmatpush1.xpose.msra.mxu0 0.0
    %1477 = vmatprep.subr.mxu0 0.0
    %1478 = vmatpush1.xpose.msra.mxu0 0.0
    %1479 = vmatprep.subr.mxu0 0.0
    %1480 = vmatpush1.xpose.msra.mxu0 0.0
    %1481 = vmatprep.subr.mxu0 0.0
    %1482 = vmatpush1.xpose.msra.mxu0 0.0
    %1483 = vmatprep.subr.mxu0 0.0
    %1484 = vmatpush1.xpose.msra.mxu0 0.0
    %1485 = vmatprep.subr.mxu0 0.0
    %1486 = vmatpush1.xpose.msra.mxu0 0.0
    %1487 = vmatprep.subr.mxu0 0.0
    %1488 = vmatpush1.xpose.msra.mxu0 0.0
    %1489 = vmatprep.subr.mxu0 0.0
    %1490 = vmatpush1.xpose.msra.mxu0 0.0
    %1491 = vmatprep.subr.mxu0 0.0
    %1492 = vmatpush1.xpose.msra.mxu0 0.0
    %1493 = vmatprep.subr.mxu0 0.0
    %1494 = vmatpush1.xpose.msra.mxu0 0.0
    %1495 = vmatprep.subr.mxu0 0.0
    %1496 = vmatpush1.xpose.msra.mxu0 0.0
    %1497 = vmatprep.subr.mxu0 0.0
    %1498 = vmatpush1.xpose.msra.mxu0 0.0
    %1499 = vmatprep.subr.mxu0 0.0
    %1500 = vmatpush1.xpose.msra.mxu0 0.0
    %1501 = vmatprep.subr.mxu0 0.0
    %1502 = vmatpush1.xpose.msra.mxu0 0.0
    %1503 = vmatprep.subr.mxu0 0.0
    %1504 = vmatpush1.xpose.msra.mxu0 0.0
    %1505 = vmatprep.subr.mxu0 0.0
    %1506 = vmatpush1.xpose.msra.mxu0 0.0
    %1507 = vmatprep.subr.mxu0 0.0
    %1508 = vmatpush1.xpose.msra.mxu0 0.0
    %1509 = vmatprep.subr.mxu0 0.0
    %1510 = vmatpush1.xpose.msra.mxu0 0.0
    %1511 = vmatprep.subr.mxu0 0.0
    %1512 = vmatpush1.xpose.msra.mxu0 0.0
    %1513 = vmatprep.subr.mxu0 0.0
    %1514 = vmatpush1.xpose.msra.mxu0 0.0
    %1515 = vmatprep.subr.mxu0 0.0
    %1516 = vmatpush1.xpose.msra.mxu0 0.0
    %1517 = vmatprep.subr.mxu0 0.0
    %1518 = vmatpush1.xpose.msra.mxu0 0.0
    %1519 = vmatprep.subr.mxu0 0.0
    %1520 = vmatpush1.xpose.msra.mxu0 0.0
    %1521 = vmatprep.subr.mxu0 0.0
    %1522 = vmatpush1.xpose.msra.mxu0 0.0
    %1523 = vmatprep.mubr.f32.mxu0 0.0
    %1524 = vmatmul.mubr.f32.gmra.mrb[0].mxu0 %v1455
    %v1525 = vpop.f32.mrb[0].mxu0
    %v1526 = vadd.f32 0.0, %v1525
    %v1527 = vpop.f32.mrb[0].mxu0
    %1528 = vdwg.mxu0
    %v1529 = vsel %vm372, %v1448, -inf
    %1530 = vmax.xlane.f32.xlu0 %v1529
    %v1531 = vpop.xlane.xlu0 %1530
    %v1532 = vsel %vm372, %v1526, -inf
    %1533 = vmax.xlane.f32.xlu0 %v1532
    %v1534 = vpop.xlane.xlu0 %1533
    %v1535 = vsub.f32 %v1448, %v1531
    %v1536 = vsub.f32 %v1526, %v1534
    %v1537 = vmul.f32 %v1535, 1.442695
    %v1538 = vpow.pop %v1537
    %v1539 = vmul.f32 %v1536, 1.442695
    %v1540 = vpow.pop %v1539
    %v1541 = vsel %vm372, %v1538, 0.0
    %1542 = vadd.xlane.f32.xlu0 %v1541
    %v1543 = vpop.xlane.xlu0 %1542
    %v1544 = vsel %vm372, %v1540, 0.0
    %1545 = vadd.xlane.f32.xlu0 %v1544
    %v1546 = vpop.xlane.xlu0 %1545
    %v1547 = vrcp.pop %v1543
    %v1548 = vrcp.pop %v1546
    %v1549 = vmul.f32 %v1543, %v1547
    %v1550 = vmul.f32 %v1546, %v1548
    %v1551 = vsub.f32 2.0, %v1549
    %v1552 = vsub.f32 2.0, %v1550
    %v1553 = vmul.f32 %v1547, %v1551
    %v1554 = vmul.f32 %v1548, %v1552
    %1555 = vrot.lane.b32.xlu0 %v362, 104
    %v1556 = vpop.permute.xlu0 %1555
    %v1559 = vsel %vm372, %v1538, 0
    %1561 = vmatprep.subr.mxu0 0.0
    %1562 = vmatpush1.msra.mxu0 %v1556
    %1563 = vmatprep.subr.mxu0 0.0
    %1564 = vmatpush1.msra.mxu0 0.0
    %1565 = vmatprep.subr.mxu0 0.0
    %1566 = vmatpush1.msra.mxu0 0.0
    %1567 = vmatprep.subr.mxu0 0.0
    %1568 = vmatpush1.msra.mxu0 0.0
    %1569 = vmatprep.subr.mxu0 0.0
    %1570 = vmatpush1.msra.mxu0 0.0
    %1571 = vmatprep.subr.mxu0 0.0
    %1572 = vmatpush1.msra.mxu0 0.0
    %1573 = vmatprep.subr.mxu0 0.0
    %1574 = vmatpush1.msra.mxu0 0.0
    %1575 = vmatprep.subr.mxu0 0.0
    %1576 = vmatpush1.msra.mxu0 0.0
    %1577 = vmatprep.subr.mxu0 0.0
    %1578 = vmatpush1.msra.mxu0 0.0
    %1579 = vmatprep.subr.mxu0 0.0
    %1580 = vmatpush1.msra.mxu0 0.0
    %1581 = vmatprep.subr.mxu0 0.0
    %1582 = vmatpush1.msra.mxu0 0.0
    %1583 = vmatprep.subr.mxu0 0.0
    %1584 = vmatpush1.msra.mxu0 0.0
    %1585 = vmatprep.subr.mxu0 0.0
    %1586 = vmatpush1.msra.mxu0 0.0
    %1587 = vmatprep.subr.mxu0 0.0
    %1588 = vmatpush1.msra.mxu0 0.0
    %1589 = vmatprep.subr.mxu0 0.0
    %1590 = vmatpush1.msra.mxu0 0.0
    %1591 = vmatprep.subr.mxu0 0.0
    %1592 = vmatpush1.msra.mxu0 0.0
    %1593 = vmatprep.subr.mxu0 0.0
    %1594 = vmatpush1.msra.mxu0 0.0
    %1595 = vmatprep.subr.mxu0 0.0
    %1596 = vmatpush1.msra.mxu0 0.0
    %1597 = vmatprep.subr.mxu0 0.0
    %1598 = vmatpush1.msra.mxu0 0.0
    %1599 = vmatprep.subr.mxu0 0.0
    %1600 = vmatpush1.msra.mxu0 0.0
    %1601 = vmatprep.subr.mxu0 0.0
    %1602 = vmatpush1.msra.mxu0 0.0
    %1603 = vmatprep.subr.mxu0 0.0
    %1604 = vmatpush1.msra.mxu0 0.0
    %1605 = vmatprep.subr.mxu0 0.0
    %1606 = vmatpush1.msra.mxu0 0.0
    %1607 = vmatprep.subr.mxu0 0.0
    %1608 = vmatpush1.msra.mxu0 0.0
    %1609 = vmatprep.subr.mxu0 0.0
    %1610 = vmatpush1.msra.mxu0 0.0
    %1611 = vmatprep.subr.mxu0 0.0
    %1612 = vmatpush1.msra.mxu0 0.0
    %1613 = vmatprep.subr.mxu0 0.0
    %1614 = vmatpush1.msra.mxu0 0.0
    %1615 = vmatprep.subr.mxu0 0.0
    %1616 = vmatpush1.msra.mxu0 0.0
    %1617 = vmatprep.subr.mxu0 0.0
    %1618 = vmatpush1.msra.mxu0 0.0
    %1619 = vmatprep.subr.mxu0 0.0
    %1620 = vmatpush1.msra.mxu0 0.0
    %1621 = vmatprep.subr.mxu0 0.0
    %1622 = vmatpush1.msra.mxu0 0.0
    %1623 = vmatprep.subr.mxu0 0.0
    %1624 = vmatpush1.msra.mxu0 0.0
    %1625 = vmatprep.mubr.f32.mxu0 0.0
    %1626 = vmatmul.mubr.f32.gmra.mrb[0].mxu0 %v1559
    %v1627 = vpop.f32.mrb[0].mxu0
    %v1628 = vadd.f32 0.0, %v1627
    %v1629 = vpop.f32.mrb[0].mxu0
    %1630 = vdwg.mxu0
    %1631 = vrot.lane.b32.xlu0 %v367, 104
    %v1632 = vpop.permute.xlu0 %1631
    %v1635 = vsel %vm372, %v1540, 0
    %1637 = vmatprep.subr.mxu0 0.0
    %1638 = vmatpush1.msra.mxu0 %v1632
    %1639 = vmatprep.subr.mxu0 0.0
    %1640 = vmatpush1.msra.mxu0 0.0
    %1641 = vmatprep.subr.mxu0 0.0
    %1642 = vmatpush1.msra.mxu0 0.0
    %1643 = vmatprep.subr.mxu0 0.0
    %1644 = vmatpush1.msra.mxu0 0.0
    %1645 = vmatprep.subr.mxu0 0.0
    %1646 = vmatpush1.msra.mxu0 0.0
    %1647 = vmatprep.subr.mxu0 0.0
    %1648 = vmatpush1.msra.mxu0 0.0
    %1649 = vmatprep.subr.mxu0 0.0
    %1650 = vmatpush1.msra.mxu0 0.0
    %1651 = vmatprep.subr.mxu0 0.0
    %1652 = vmatpush1.msra.mxu0 0.0
    %1653 = vmatprep.subr.mxu0 0.0
    %1654 = vmatpush1.msra.mxu0 0.0
    %1655 = vmatprep.subr.mxu0 0.0
    %1656 = vmatpush1.msra.mxu0 0.0
    %1657 = vmatprep.subr.mxu0 0.0
    %1658 = vmatpush1.msra.mxu0 0.0
    %1659 = vmatprep.subr.mxu0 0.0
    %1660 = vmatpush1.msra.mxu0 0.0
    %1661 = vmatprep.subr.mxu0 0.0
    %1662 = vmatpush1.msra.mxu0 0.0
    %1663 = vmatprep.subr.mxu0 0.0
    %1664 = vmatpush1.msra.mxu0 0.0
    %1665 = vmatprep.subr.mxu0 0.0
    %1666 = vmatpush1.msra.mxu0 0.0
    %1667 = vmatprep.subr.mxu0 0.0
    %1668 = vmatpush1.msra.mxu0 0.0
    %1669 = vmatprep.subr.mxu0 0.0
    %1670 = vmatpush1.msra.mxu0 0.0
    %1671 = vmatprep.subr.mxu0 0.0
    %1672 = vmatpush1.msra.mxu0 0.0
    %1673 = vmatprep.subr.mxu0 0.0
    %1674 = vmatpush1.msra.mxu0 0.0
    %1675 = vmatprep.subr.mxu0 0.0
    %1676 = vmatpush1.msra.mxu0 0.0
    %1677 = vmatprep.subr.mxu0 0.0
    %1678 = vmatpush1.msra.mxu0 0.0
    %1679 = vmatprep.subr.mxu0 0.0
    %1680 = vmatpush1.msra.mxu0 0.0
    %1681 = vmatprep.subr.mxu0 0.0
    %1682 = vmatpush1.msra.mxu0 0.0
    %1683 = vmatprep.subr.mxu0 0.0
    %1684 = vmatpush1.msra.mxu0 0.0
    %1685 = vmatprep.subr.mxu0 0.0
    %1686 = vmatpush1.msra.mxu0 0.0
    %1687 = vmatprep.subr.mxu0 0.0
    %1688 = vmatpush1.msra.mxu0 0.0
    %1689 = vmatprep.subr.mxu0 0.0
    %1690 = vmatpush1.msra.mxu0 0.0
    %1691 = vmatprep.subr.mxu0 0.0
    %1692 = vmatpush1.msra.mxu0 0.0
    %1693 = vmatprep.subr.mxu0 0.0
    %1694 = vmatpush1.msra.mxu0 0.0
    %1695 = vmatprep.subr.mxu0 0.0
    %1696 = vmatpush1.msra.mxu0 0.0
    %1697 = vmatprep.subr.mxu0 0.0
    %1698 = vmatpush1.msra.mxu0 0.0
    %1699 = vmatprep.subr.mxu0 0.0
    %1700 = vmatpush1.msra.mxu0 0.0
    %1701 = vmatprep.mubr.f32.mxu0 0.0
    %1702 = vmatmul.mubr.f32.gmra.mrb[0].mxu0 %v1635
    %v1703 = vpop.f32.mrb[0].mxu0
    %v1704 = vadd.f32 0.0, %v1703
    %v1705 = vpop.f32.mrb[0].mxu0
    %1706 = vdwg.mxu0
    %v1707 = vmul.f32 %v1628, %v1553
    %v1708 = vmul.f32 %v1704, %v1554
    %1711 = vrot.lane.b32.xlu0 %v1035, 8
    %v1712 = vpop.permute.xlu0 %1711
    %1713 = vrot.lane.b32.xlu0 %v1036, 8
    %v1714 = vpop.permute.xlu0 %1713
    %1719 = vrot.lane.b32.xlu0 %v1371, 16
    %v1720 = vpop.permute.xlu0 %1719
    %1721 = vrot.lane.b32.xlu0 %v1372, 16
    %v1722 = vpop.permute.xlu0 %1721
    %1727 = vrot.lane.b32.xlu0 %v1707, 24
    %v1728 = vpop.permute.xlu0 %1727
    %1729 = vrot.lane.b32.xlu0 %v1708, 24
    %v1730 = vpop.permute.xlu0 %1729
    %v1733 = vsel %vm372, %v697, %v1712
    %v1734 = vsel %vm372, %v698, %v1714
    %vm1735 = vcmask 130048
    %v1736 = vsel %vm1735, %v1733, %v1720
    %v1737 = vsel %vm1735, %v1734, %v1722
    %vm1738 = vcmask 195584
    %v1739 = vsel %vm1738, %v1736, %v1728
    %v1740 = vsel %vm1738, %v1737, %v1730
    %1741 = vst.msk [vmem:[#allocation13] sm:$0xff] %vm116, %v1739
    %1742 = vst.msk [vmem:[#allocation13 + $0x8] sm:$0xff] %vm116, %v1740
    // Predicated region
    $region50: #{tpu_custom_call.1} parent=1 // pred_check
      _
    $region51: #{tpu_custom_call.1} parent=1 // pred_check_branch
      %1744 = sbr.rel (0) target = $region53
    $region52: #{tpu_custom_call.1} parent=1 // pred_region
      %s1746 = ssub.s32 256, 256
      %1747 = vsyncadd [#allocation4], %s1746
      %s1748 = sshll.u32 [#allocation13], 4
      %s1749 = int_to_ptr.vmem [resolvable:$true] %s1748
      %1754 = dma.vmem_to_hbm [thread:$0]  %s1749, 256, %s6, [#allocation4], 128, 128, 8
    $region53: #{tpu_custom_call.1} parent=1 // pred_fallthru
      _
    // Predicated region
    $region54: #{tpu_custom_call.1} parent=1 // pred_check
      _
    $region55: #{tpu_custom_call.1} parent=1 // pred_check_branch
      %1756 = sbr.rel (0) target = $region57
    $region56: #{tpu_custom_call.1} parent=1 // pred_region
      %1757 = dma.done [#allocation4], 256
    $region57: #{tpu_custom_call.1} parent=1 // pred_fallthru
      _
    %1758 = vsyncpa [#allocation3], 1
    %1759 = vsyncpa [#allocation6], 1
    %1760 = vsyncpa [#allocation9], 1
    %1761 = vsyncpa [#allocation12], 1
    %1762 = vsyncpa [#allocation4], 1

</llo_original>
